<compile_context>
chip_gen: v5e
topology: v5e:2x2
jax: 0.10.0
libtpu: 0.0.40
codegen_flags: <defaults>
</compile_context>

<pallas_src>
import functools

import jax
import jax.numpy as jnp
from jax import lax
from jax.experimental import pallas as pl
from jax.experimental.pallas import tpu as pltpu


def _choose_block(n, max_block=512):
    """Pad n to a multiple of 128 and pick the largest block dividing it."""
    padded = ((n + 127) // 128) * 128
    for b in (max_block, 256, 128):
        if b <= padded and padded % b == 0:
            return padded, b
    return padded, padded  # unreachable: 128 always divides `padded`


# ----------------------------------------------------------------------------
# Fused kernel: QKV projections + flash attention + merge projection.
# Grid = (B, Nq_tiles, KV_tiles); KV axis is the reduction ("arbitrary", last).
# ----------------------------------------------------------------------------
def _fused_mha_kernel(q_ref, k_ref, v_ref, wq_ref, bq_ref, wk_ref, bk_ref,
                      wv_ref, bv_ref, wm_ref, bm_ref, o_ref,
                      qs_ref, acc_ref, m_ref, l_ref,
                      *, num_heads, kv_len, matmul_dtype, mask_kv):
    j = pl.program_id(2)
    d_model, block_q = qs_ref.shape
    dim = d_model // num_heads
    block_kv = k_ref.shape[-1]

    # --- init + Q projection once per (batch, q-tile) --------------------
    @pl.when(j == 0)
    def _():
        xq = q_ref[0].astype(matmul_dtype)                       # (D, TQ)
        wq = wq_ref[...].astype(matmul_dtype)                    # (D, D) (scale folded)
        q = lax.dot_general(wq, xq, (((1,), (0,)), ((), ())),
                            preferred_element_type=jnp.float32) + bq_ref[...]
        qs_ref[...] = q.astype(qs_ref.dtype)
        m_ref[...] = jnp.full_like(m_ref, -jnp.inf)
        l_ref[...] = jnp.zeros_like(l_ref)
        acc_ref[...] = jnp.zeros_like(acc_ref)

    # --- K / V projection for this KV tile (fused: no HBM round-trip) ----
    xk = k_ref[0].astype(matmul_dtype)                           # (D, TK)
    xv = v_ref[0].astype(matmul_dtype)
    k = (lax.dot_general(wk_ref[...].astype(matmul_dtype), xk,
                         (((1,), (0,)), ((), ())),
                         preferred_element_type=jnp.float32)
         + bk_ref[...]).astype(matmul_dtype)                     # (D, TK)
    v = (lax.dot_general(wv_ref[...].astype(matmul_dtype), xv,
                         (((1,), (0,)), ((), ())),
                         preferred_element_type=jnp.float32)
         + bv_ref[...]).astype(matmul_dtype)                     # (D, TK)

    if mask_kv:
        col = lax.broadcasted_iota(jnp.int32, (block_kv, 1), 0) + j * block_kv
        valid = col < kv_len                                     # (TK, 1)

    # --- online softmax per head (static unroll; fine for small H) -------
    # TODO(synk): for H > 8 move heads to a "parallel" grid axis (or
    # lax.fori_loop(unroll=True)) to bound vreg live ranges.
    for h in range(num_heads):
        lo = h * dim
        q_h = qs_ref[lo:lo + dim, :]                             # (dim, TQ)
        k_h = k[lo:lo + dim, :]                                  # (dim, TK)
        v_h = v[lo:lo + dim, :]                                  # (dim, TK)

        # scores in (TK, TQ): lane-dense in TQ, softmax stats are row vectors.
        s = lax.dot_general(k_h, q_h, (((0,), (0,)), ((), ())),
                            preferred_element_type=jnp.float32)  # (TK, TQ)
        if mask_kv:
            s = jnp.where(valid, s, -jnp.inf)

        m_prev = m_ref[h]                                        # (1, TQ)
        m_new = jnp.maximum(m_prev, jnp.max(s, axis=0, keepdims=True))
        alpha = jnp.exp(m_prev - m_new)                          # (1, TQ)
        p = jnp.exp(s - m_new)                                   # (TK, TQ) f32

        l_ref[h] = alpha * l_ref[h] + jnp.sum(p, axis=0, keepdims=True)
        m_ref[h] = m_new

        pv = lax.dot_general(v_h, p.astype(matmul_dtype),
                             (((1,), (0,)), ((), ())),
                             preferred_element_type=jnp.float32)  # (dim, TQ)
        acc_ref[h] = alpha * acc_ref[h] + pv                      # full-tile store

    # --- epilogue: normalize + merge conv, single lane-dense output write -
    @pl.when(j == pl.num_programs(2) - 1)
    def _():
        wm = wm_ref[...].astype(matmul_dtype)
        out = bm_ref[...]                                        # (D, 1) broadcast below
        for h in range(num_heads):
            lo = h * dim
            # approx=True runs on the EUP (free slot) if ~1e-2 tolerance is OK.
            inv_l = pl.reciprocal(l_ref[h], approx=False)        # (1, TQ)
            ctx_h = (acc_ref[h] * inv_l).astype(matmul_dtype)    # (dim, TQ)
            out = out + lax.dot_general(wm[:, lo:lo + dim], ctx_h,
                                        (((1,), (0,)), ((), ())),
                                        preferred_element_type=jnp.float32)
        o_ref[0] = out.astype(o_ref.dtype)                       # (D, TQ)


def _fused_mha(q, k, v, wq, bq, wk, bk, wv, bv, wm, bm, *,
               num_heads, kv_len, block_q, block_kv, matmul_dtype):
    B, d_model, Np = q.shape
    Mp = k.shape[-1]
    dim = d_model // num_heads
    mask_kv = kv_len != Mp

    kern = functools.partial(_fused_mha_kernel, num_heads=num_heads,
                             kv_len=kv_len, matmul_dtype=matmul_dtype,
                             mask_kv=mask_kv)

    # Accurate VMEM footprint (double-buffered blocks + resident weights +
    # scratch) instead of a blanket limit; stays well inside v7x's 64 MiB.
    itm = jnp.dtype(q.dtype).itemsize
    mitm = jnp.dtype(matmul_dtype).itemsize
    vmem_est = (
        2 * (d_model * block_q * itm                 # query block
             + 2 * d_model * block_kv * itm          # key + value blocks
             + d_model * block_q * itm)              # output block
        + 2 * (4 * d_model * d_model + 4 * d_model) * itm   # weights + biases
        + d_model * block_q * mitm                   # projected-Q scratch
        + num_heads * max(dim, 8) * block_q * 4      # acc (sublane padded)
        + 2 * num_heads * 8 * block_q * 4            # m, l (sublane padded)
        + (4 << 20))                                 # headroom for internal scratch
    vmem_limit = int(min(max(vmem_est, 16 << 20), 64 << 20))

    return pl.pallas_call(
        kern,
        out_shape=jax.ShapeDtypeStruct((B, d_model, Np), q.dtype),
        grid_spec=pltpu.PrefetchScalarGridSpec(
            num_scalar_prefetch=0,
            grid=(B, Np // block_q, Mp // block_kv),
            in_specs=[
                pl.BlockSpec((1, d_model, block_q), lambda b, i, j: (b, 0, i)),
                pl.BlockSpec((1, d_model, block_kv), lambda b, i, j: (b, 0, j)),
                pl.BlockSpec((1, d_model, block_kv), lambda b, i, j: (b, 0, j)),
                pl.BlockSpec((d_model, d_model), lambda b, i, j: (0, 0)),  # Wq (scaled)
                pl.BlockSpec((d_model, 1), lambda b, i, j: (0, 0)),        # bq (scaled)
                pl.BlockSpec((d_model, d_model), lambda b, i, j: (0, 0)),  # Wk
                pl.BlockSpec((d_model, 1), lambda b, i, j: (0, 0)),        # bk
                pl.BlockSpec((d_model, d_model), lambda b, i, j: (0, 0)),  # Wv
                pl.BlockSpec((d_model, 1), lambda b, i, j: (0, 0)),        # bv
                pl.BlockSpec((d_model, d_model), lambda b, i, j: (0, 0)),  # Wmerge
                pl.BlockSpec((d_model, 1), lambda b, i, j: (0, 0)),        # bmerge
            ],
            out_specs=pl.BlockSpec((1, d_model, block_q),
                                   lambda b, i, j: (b, 0, i)),
            scratch_shapes=[
                pltpu.VMEM((d_model, block_q), matmul_dtype),        # projected Q
                pltpu.VMEM((num_heads, dim, block_q), jnp.float32),  # acc (head-leading)
                pltpu.VMEM((num_heads, 1, block_q), jnp.float32),    # running max
                pltpu.VMEM((num_heads, 1, block_q), jnp.float32),    # running sum
            ],
        ),
        compiler_params=pltpu.CompilerParams(
            dimension_semantics=("parallel", "parallel", "arbitrary"),
            vmem_limit_bytes=vmem_limit),
    )(q, k, v, wq, bq, wk, bk, wv, bv, wm, bm)


# ----------------------------------------------------------------------------
# Full forward pass.  Weight permutation / scale folding would be done once
# offline on the checkpoint in production; here it's applied to tiny matrices.
# ----------------------------------------------------------------------------
def multi_headed_attention(params, query, key, value, num_heads,
                           *, matmul_dtype=jnp.float32, max_block=512):
    B, d_model, N = query.shape
    M = key.shape[-1]
    assert d_model % num_heads == 0
    dim = d_model // num_heads
    scale = 1.0 / (dim ** 0.5)

    # head-major permutation: new channel p = h*dim + d  <-  old channel d*H + h
    p = jnp.arange(d_model)
    perm = (p % dim) * num_heads + (p // dim)

    wq = params["proj0_w"][perm, :] * scale        # fold 1/sqrt(dim) into Q proj
    bq = params["proj0_b"][perm, :] * scale
    wk = params["proj1_w"][perm, :]
    bk = params["proj1_b"][perm, :]
    wv = params["proj2_w"][perm, :]
    bv = params["proj2_b"][perm, :]
    wm = params["merge_w"][:, perm]
    bm = params["merge_b"]

    # Pad sequences to a multiple of 128 (lane-dense tiles); padded KV columns
    # are masked inside the kernel, padded Q columns sliced off below.
    padded_n, block_q = _choose_block(N, max_block)
    padded_m, block_kv = _choose_block(M, max_block)
    q_in = query if padded_n == N else jnp.pad(query, ((0, 0), (0, 0), (0, padded_n - N)))
    k_in = key if padded_m == M else jnp.pad(key, ((0, 0), (0, 0), (0, padded_m - M)))
    v_in = value if padded_m == M else jnp.pad(value, ((0, 0), (0, 0), (0, padded_m - M)))

    out = _fused_mha(q_in, k_in, v_in, wq, bq, wk, bk, wv, bv, wm, bm,
                     num_heads=num_heads, kv_len=M,
                     block_q=block_q, block_kv=block_kv,
                     matmul_dtype=matmul_dtype)
    return out[:, :, :N] if padded_n != N else out


# ----------------------------------------------------------------------------
# Pure-JAX reference mirroring the PyTorch module exactly.
# ----------------------------------------------------------------------------
def reference_forward(params, query, key, value, num_heads):
    B, d_model, N = query.shape
    dim = d_model // num_heads

    def conv1x1(x, w, b):
        return jnp.einsum('oc,bcn->bon', w, x) + b[None, :, :]

    projected = []
    for i, x in enumerate((query, key, value)):
        y = conv1x1(x, params[f"proj{i}_w"], params[f"proj{i}_b"])
        projected.append(y.reshape(B, dim, num_heads, -1))
    q, k, v = projected
    scores = jnp.einsum('bdhn,bdhm->bhnm', q, k) / (dim ** 0.5)
    prob = jax.nn.softmax(scores, axis=-1)
    x = jnp.einsum('bhnm,bdhm->bdhn', prob, v)
    x = x.reshape(B, dim * num_heads, -1)
    return conv1x1(x, params["merge_w"], params["merge_b"])


if __name__ == "__main__":
    B, d_model, num_heads, N = 2, 32, 4, 16

    key0 = jax.random.PRNGKey(0)
    keys = jax.random.split(key0, 12)

    # Conv1d(d_model, d_model, kernel_size=1): weight (d_model, d_model), bias (d_model, 1)
    params = {}
    for i in range(3):
        params[f"proj{i}_w"] = 0.1 * jax.random.normal(
            keys[2 * i], (d_model, d_model), jnp.float32)
        params[f"proj{i}_b"] = 0.1 * jax.random.normal(
            keys[2 * i + 1], (d_model, 1), jnp.float32)
    params["merge_w"] = 0.1 * jax.random.normal(keys[6], (d_model, d_model), jnp.float32)
    params["merge_b"] = 0.1 * jax.random.normal(keys[7], (d_model, 1), jnp.float32)

    query = jax.random.normal(keys[8], (B, d_model, N), jnp.float32)
    key_in = jax.random.normal(keys[9], (B, d_model, N), jnp.float32)
    value = jax.random.normal(keys[10], (B, d_model, N), jnp.float32)

    # NOTE: set matmul_dtype=jnp.bfloat16 on v6e/v7x for MXU throughput
    # (re-validate with ~1e-2 tolerance); f32 here to match the strict check.
    out = multi_headed_attention(params, query, key_in, value, num_heads,
                                 matmul_dtype=jnp.float32)
    out = jax.block_until_ready(out)

    ref = reference_forward(params, query, key_in, value, num_heads)
    assert out.shape == (B, d_model, N)
    assert jnp.allclose(out, ref, atol=1e-4, rtol=1e-4), "mismatch vs reference"

    print("KERNEL_OK")
</pallas_src>

<mosaic_0001>
module attributes {stable_mosaic.version = 11 : i64} {
  func.func @_fused_mha_kernel(%arg0: i32, %arg1: i32, %arg2: i32, %arg3: memref<1x32x128xf32, #tpu.memory_space<vmem>>, %arg4: memref<1x32x128xf32, #tpu.memory_space<vmem>>, %arg5: memref<1x32x128xf32, #tpu.memory_space<vmem>>, %arg6: memref<32x32xf32, #tpu.memory_space<vmem>>, %arg7: memref<32x1xf32, #tpu.memory_space<vmem>>, %arg8: memref<32x32xf32, #tpu.memory_space<vmem>>, %arg9: memref<32x1xf32, #tpu.memory_space<vmem>>, %arg10: memref<32x32xf32, #tpu.memory_space<vmem>>, %arg11: memref<32x1xf32, #tpu.memory_space<vmem>>, %arg12: memref<32x32xf32, #tpu.memory_space<vmem>>, %arg13: memref<32x1xf32, #tpu.memory_space<vmem>>, %arg14: memref<1x32x128xf32, #tpu.memory_space<vmem>>, %arg15: memref<32x128xf32, #tpu.memory_space<vmem>>, %arg16: memref<4x8x128xf32, #tpu.memory_space<vmem>>, %arg17: memref<4x1x128xf32, #tpu.memory_space<vmem>>, %arg18: memref<4x1x128xf32, #tpu.memory_space<vmem>>) attributes {dimension_semantics = [#tpu.dimension_semantics<parallel>, #tpu.dimension_semantics<parallel>, #tpu.dimension_semantics<arbitrary>], iteration_bounds = array<i64: 2, 1, 1>, scalar_prefetch = 0 : i64, scratch_operands = 4 : i64, tpu.core_type = #tpu.core_type<tc>, window_params = [{transform_indices = @transform_0, window_bounds = array<i64: 1, 32, 128>}, {transform_indices = @transform_1, window_bounds = array<i64: 1, 32, 128>}, {transform_indices = @transform_2, window_bounds = array<i64: 1, 32, 128>}, {pipeline_mode = #tpu.pipeline_mode<synchronous>, transform_indices = @transform_3, window_bounds = array<i64: 32, 32>}, {pipeline_mode = #tpu.pipeline_mode<synchronous>, transform_indices = @transform_4, window_bounds = array<i64: 32, 1>}, {pipeline_mode = #tpu.pipeline_mode<synchronous>, transform_indices = @transform_5, window_bounds = array<i64: 32, 32>}, {pipeline_mode = #tpu.pipeline_mode<synchronous>, transform_indices = @transform_6, window_bounds = array<i64: 32, 1>}, {pipeline_mode = #tpu.pipeline_mode<synchronous>, transform_indices = @transform_7, window_bounds = array<i64: 32, 32>}, {pipeline_mode = #tpu.pipeline_mode<synchronous>, transform_indices = @transform_8, window_bounds = array<i64: 32, 1>}, {pipeline_mode = #tpu.pipeline_mode<synchronous>, transform_indices = @transform_9, window_bounds = array<i64: 32, 32>}, {pipeline_mode = #tpu.pipeline_mode<synchronous>, transform_indices = @transform_10, window_bounds = array<i64: 32, 1>}, {transform_indices = @transform_11, window_bounds = array<i64: 1, 32, 128>}]} {
    %c0_i32 = arith.constant 0 : i32
    %0 = arith.cmpi eq, %arg2, %c0_i32 : i32
    %1 = arith.extui %0 : i1 to i32
    %c0_i32_0 = arith.constant 0 : i32
    %2 = arith.cmpi ne, %1, %c0_i32_0 : i32
    scf.if %2 {
      %c0_111 = arith.constant 0 : index
      %c0_112 = arith.constant 0 : index
      %c0_113 = arith.constant 0 : index
      %182 = vector.load %arg3[%c0_111, %c0_112, %c0_113] : memref<1x32x128xf32, #tpu.memory_space<vmem>>, vector<1x32x128xf32>
      %183 = vector.shape_cast %182 : vector<1x32x128xf32> to vector<32x128xf32>
      %c0_114 = arith.constant 0 : index
      %c0_115 = arith.constant 0 : index
      %184 = vector.load %arg6[%c0_114, %c0_115] : memref<32x32xf32, #tpu.memory_space<vmem>>, vector<32x32xf32>
      %cst_116 = arith.constant dense<0.000000e+00> : vector<32x128xf32>
      %185 = tpu.matmul %184, %183, %cst_116 {dimension_numbers = #tpu.dot_dimension_numbers<[1], [0], [0], [1], [0, 0, 1, 1], [], []>} : vector<32x32xf32>, vector<32x128xf32>, vector<32x128xf32> -> vector<32x128xf32>
      %c0_117 = arith.constant 0 : index
      %c0_118 = arith.constant 0 : index
      %186 = vector.load %arg7[%c0_117, %c0_118] : memref<32x1xf32, #tpu.memory_space<vmem>>, vector<32x1xf32>
      %187 = vector.broadcast %186 : vector<32x1xf32> to vector<32x128xf32>
      %188 = arith.addf %185, %187 : vector<32x128xf32>
      %c0_119 = arith.constant 0 : index
      %c0_120 = arith.constant 0 : index
      %189 = vector.load %arg15[%c0_119, %c0_120] : memref<32x128xf32, #tpu.memory_space<vmem>>, vector<32x128xf32>
      tpu.vector_store %arg15[%c0_119, %c0_120], %188 {strides = array<i32>} : memref<32x128xf32, #tpu.memory_space<vmem>>, vector<32x128xf32>,
      %cst_121 = arith.constant 0xFF800000 : f32
      %190 = vector.broadcast %cst_121 : f32 to vector<4x1x128xf32>
      %c0_122 = arith.constant 0 : index
      %c0_123 = arith.constant 0 : index
      %c0_124 = arith.constant 0 : index
      %191 = vector.load %arg17[%c0_122, %c0_123, %c0_124] : memref<4x1x128xf32, #tpu.memory_space<vmem>>, vector<4x1x128xf32>
      tpu.vector_store %arg17[%c0_122, %c0_123, %c0_124], %190 {strides = array<i32>} : memref<4x1x128xf32, #tpu.memory_space<vmem>>, vector<4x1x128xf32>,
      %cst_125 = arith.constant 0.000000e+00 : f32
      %192 = vector.broadcast %cst_125 : f32 to vector<4x1x128xf32>
      %c0_126 = arith.constant 0 : index
      %c0_127 = arith.constant 0 : index
      %c0_128 = arith.constant 0 : index
      %193 = vector.load %arg18[%c0_126, %c0_127, %c0_128] : memref<4x1x128xf32, #tpu.memory_space<vmem>>, vector<4x1x128xf32>
      tpu.vector_store %arg18[%c0_126, %c0_127, %c0_128], %192 {strides = array<i32>} : memref<4x1x128xf32, #tpu.memory_space<vmem>>, vector<4x1x128xf32>,
      %cst_129 = arith.constant 0.000000e+00 : f32
      %194 = vector.broadcast %cst_129 : f32 to vector<4x8x128xf32>
      %c0_130 = arith.constant 0 : index
      %c0_131 = arith.constant 0 : index
      %c0_132 = arith.constant 0 : index
      %195 = vector.load %arg16[%c0_130, %c0_131, %c0_132] : memref<4x8x128xf32, #tpu.memory_space<vmem>>, vector<4x8x128xf32>
      tpu.vector_store %arg16[%c0_130, %c0_131, %c0_132], %194 {strides = array<i32>} : memref<4x8x128xf32, #tpu.memory_space<vmem>>, vector<4x8x128xf32>,
    } else {
    }
    %c0 = arith.constant 0 : index
    %c0_1 = arith.constant 0 : index
    %c0_2 = arith.constant 0 : index
    %3 = vector.load %arg4[%c0, %c0_1, %c0_2] : memref<1x32x128xf32, #tpu.memory_space<vmem>>, vector<1x32x128xf32>
    %4 = vector.shape_cast %3 : vector<1x32x128xf32> to vector<32x128xf32>
    %c0_3 = arith.constant 0 : index
    %c0_4 = arith.constant 0 : index
    %c0_5 = arith.constant 0 : index
    %5 = vector.load %arg5[%c0_3, %c0_4, %c0_5] : memref<1x32x128xf32, #tpu.memory_space<vmem>>, vector<1x32x128xf32>
    %6 = vector.shape_cast %5 : vector<1x32x128xf32> to vector<32x128xf32>
    %c0_6 = arith.constant 0 : index
    %c0_7 = arith.constant 0 : index
    %7 = vector.load %arg8[%c0_6, %c0_7] : memref<32x32xf32, #tpu.memory_space<vmem>>, vector<32x32xf32>
    %cst = arith.constant dense<0.000000e+00> : vector<32x128xf32>
    %8 = tpu.matmul %7, %4, %cst {dimension_numbers = #tpu.dot_dimension_numbers<[1], [0], [0], [1], [0, 0, 1, 1], [], []>} : vector<32x32xf32>, vector<32x128xf32>, vector<32x128xf32> -> vector<32x128xf32>
    %c0_8 = arith.constant 0 : index
    %c0_9 = arith.constant 0 : index
    %9 = vector.load %arg9[%c0_8, %c0_9] : memref<32x1xf32, #tpu.memory_space<vmem>>, vector<32x1xf32>
    %10 = vector.broadcast %9 : vector<32x1xf32> to vector<32x128xf32>
    %11 = arith.addf %8, %10 : vector<32x128xf32>
    %c0_10 = arith.constant 0 : index
    %c0_11 = arith.constant 0 : index
    %12 = vector.load %arg10[%c0_10, %c0_11] : memref<32x32xf32, #tpu.memory_space<vmem>>, vector<32x32xf32>
    %cst_12 = arith.constant dense<0.000000e+00> : vector<32x128xf32>
    %13 = tpu.matmul %12, %6, %cst_12 {dimension_numbers = #tpu.dot_dimension_numbers<[1], [0], [0], [1], [0, 0, 1, 1], [], []>} : vector<32x32xf32>, vector<32x128xf32>, vector<32x128xf32> -> vector<32x128xf32>
    %c0_13 = arith.constant 0 : index
    %c0_14 = arith.constant 0 : index
    %14 = vector.load %arg11[%c0_13, %c0_14] : memref<32x1xf32, #tpu.memory_space<vmem>>, vector<32x1xf32>
    %15 = vector.broadcast %14 : vector<32x1xf32> to vector<32x128xf32>
    %16 = arith.addf %13, %15 : vector<32x128xf32>
    %17 = tpu.iota {dimensions = array<i32: 0>} : vector<128x1xi32>
    %c128_i32 = arith.constant 128 : i32
    %18 = arith.muli %arg2, %c128_i32 : i32
    %19 = vector.broadcast %18 : i32 to vector<128x1xi32>
    %20 = arith.addi %17, %19 : vector<128x1xi32>
    %c16_i32 = arith.constant 16 : i32
    %21 = vector.broadcast %c16_i32 : i32 to vector<128x1xi32>
    %22 = arith.cmpi slt, %20, %21 : vector<128x1xi32>
    %c0_15 = arith.constant 0 : index
    %c0_16 = arith.constant 0 : index
    %23 = vector.load %arg15[%c0_15, %c0_16] : memref<32x128xf32, #tpu.memory_space<vmem>>, vector<8x128xf32>
    %24 = vector.extract_strided_slice %11 {offsets = [0, 0], sizes = [8, 128], strides = [1, 1]} : vector<32x128xf32> to vector<8x128xf32>
    %25 = vector.extract_strided_slice %16 {offsets = [0, 0], sizes = [8, 128], strides = [1, 1]} : vector<32x128xf32> to vector<8x128xf32>
    %cst_17 = arith.constant dense<0.000000e+00> : vector<128x128xf32>
    %26 = tpu.matmul %24, %23, %cst_17 {dimension_numbers = #tpu.dot_dimension_numbers<[0], [0], [1], [1], [0, 1, 1, 1], [], []>} : vector<8x128xf32>, vector<8x128xf32>, vector<128x128xf32> -> vector<128x128xf32>
    %cst_18 = arith.constant 0xFF800000 : f32
    %27 = vector.shape_cast %22 : vector<128x1xi1> to vector<128x1xi1>
    %28 = vector.broadcast %27 : vector<128x1xi1> to vector<128x128xi1>
    %29 = vector.broadcast %cst_18 : f32 to vector<128x128xf32>
    %30 = arith.select %28, %26, %29 : vector<128x128xi1>, vector<128x128xf32>
    %c0_19 = arith.constant 0 : index
    %c0_20 = arith.constant 0 : index
    %c0_21 = arith.constant 0 : index
    %31 = vector.load %arg17[%c0_19, %c0_20, %c0_21] : memref<4x1x128xf32, #tpu.memory_space<vmem>>, vector<1x1x128xf32>
    %32 = vector.shape_cast %31 : vector<1x1x128xf32> to vector<1x128xf32>
    %cst_22 = arith.constant dense<0xFF800000> : vector<128xf32>
    %33 = vector.multi_reduction <maximumf>, %30, %cst_22 [0] : vector<128x128xf32> to vector<128xf32>
    %34 = vector.shape_cast %33 : vector<128xf32> to vector<1x128xf32>
    %35 = arith.maximumf %32, %34 : vector<1x128xf32>
    %36 = arith.subf %32, %35 : vector<1x128xf32>
    %37 = math.exp %36 : vector<1x128xf32>
    %38 = vector.broadcast %35 : vector<1x128xf32> to vector<128x128xf32>
    %39 = arith.subf %30, %38 : vector<128x128xf32>
    %40 = math.exp %39 : vector<128x128xf32>
    %c0_23 = arith.constant 0 : index
    %c0_24 = arith.constant 0 : index
    %c0_25 = arith.constant 0 : index
    %41 = vector.load %arg18[%c0_23, %c0_24, %c0_25] : memref<4x1x128xf32, #tpu.memory_space<vmem>>, vector<1x1x128xf32>
    %42 = vector.shape_cast %41 : vector<1x1x128xf32> to vector<1x128xf32>
    %43 = arith.mulf %37, %42 : vector<1x128xf32>
    %cst_26 = arith.constant dense<0.000000e+00> : vector<128xf32>
    %44 = vector.multi_reduction <add>, %40, %cst_26 [0] : vector<128x128xf32> to vector<128xf32>
    %45 = vector.shape_cast %44 : vector<128xf32> to vector<1x128xf32>
    %46 = arith.addf %43, %45 : vector<1x128xf32>
    %c0_27 = arith.constant 0 : index
    %c0_28 = arith.constant 0 : index
    %c0_29 = arith.constant 0 : index
    %47 = vector.load %arg18[%c0_27, %c0_28, %c0_29] : memref<4x1x128xf32, #tpu.memory_space<vmem>>, vector<1x1x128xf32>
    %48 = vector.shape_cast %47 : vector<1x1x128xf32> to vector<1x128xf32>
    %49 = vector.shape_cast %46 : vector<1x128xf32> to vector<1x1x128xf32>
    tpu.vector_store %arg18[%c0_27, %c0_28, %c0_29], %49 {strides = array<i32>} : memref<4x1x128xf32, #tpu.memory_space<vmem>>, vector<1x1x128xf32>,
    %c0_30 = arith.constant 0 : index
    %c0_31 = arith.constant 0 : index
    %c0_32 = arith.constant 0 : index
    %50 = vector.load %arg17[%c0_30, %c0_31, %c0_32] : memref<4x1x128xf32, #tpu.memory_space<vmem>>, vector<1x1x128xf32>
    %51 = vector.shape_cast %50 : vector<1x1x128xf32> to vector<1x128xf32>
    %52 = vector.shape_cast %35 : vector<1x128xf32> to vector<1x1x128xf32>
    tpu.vector_store %arg17[%c0_30, %c0_31, %c0_32], %52 {strides = array<i32>} : memref<4x1x128xf32, #tpu.memory_space<vmem>>, vector<1x1x128xf32>,
    %cst_33 = arith.constant dense<0.000000e+00> : vector<8x128xf32>
    %53 = tpu.matmul %25, %40, %cst_33 {dimension_numbers = #tpu.dot_dimension_numbers<[1], [0], [0], [1], [0, 0, 1, 1], [], []>} : vector<8x128xf32>, vector<128x128xf32>, vector<8x128xf32> -> vector<8x128xf32>
    %c0_34 = arith.constant 0 : index
    %c0_35 = arith.constant 0 : index
    %c0_36 = arith.constant 0 : index
    %54 = vector.load %arg16[%c0_34, %c0_35, %c0_36] : memref<4x8x128xf32, #tpu.memory_space<vmem>>, vector<1x8x128xf32>
    %55 = vector.shape_cast %54 : vector<1x8x128xf32> to vector<8x128xf32>
    %56 = vector.broadcast %37 : vector<1x128xf32> to vector<8x128xf32>
    %57 = arith.mulf %56, %55 : vector<8x128xf32>
    %58 = arith.addf %57, %53 : vector<8x128xf32>
    %c0_37 = arith.constant 0 : index
    %c0_38 = arith.constant 0 : index
    %c0_39 = arith.constant 0 : index
    %59 = vector.load %arg16[%c0_37, %c0_38, %c0_39] : memref<4x8x128xf32, #tpu.memory_space<vmem>>, vector<1x8x128xf32>
    %60 = vector.shape_cast %59 : vector<1x8x128xf32> to vector<8x128xf32>
    %61 = vector.shape_cast %58 : vector<8x128xf32> to vector<1x8x128xf32>
    tpu.vector_store %arg16[%c0_37, %c0_38, %c0_39], %61 {strides = array<i32>} : memref<4x8x128xf32, #tpu.memory_space<vmem>>, vector<1x8x128xf32>,
    %c8 = arith.constant 8 : index
    %c0_40 = arith.constant 0 : index
    %62 = vector.load %arg15[%c8, %c0_40] : memref<32x128xf32, #tpu.memory_space<vmem>>, vector<8x128xf32>
    %63 = vector.extract_strided_slice %11 {offsets = [8, 0], sizes = [8, 128], strides = [1, 1]} : vector<32x128xf32> to vector<8x128xf32>
    %64 = vector.extract_strided_slice %16 {offsets = [8, 0], sizes = [8, 128], strides = [1, 1]} : vector<32x128xf32> to vector<8x128xf32>
    %cst_41 = arith.constant dense<0.000000e+00> : vector<128x128xf32>
    %65 = tpu.matmul %63, %62, %cst_41 {dimension_numbers = #tpu.dot_dimension_numbers<[0], [0], [1], [1], [0, 1, 1, 1], [], []>} : vector<8x128xf32>, vector<8x128xf32>, vector<128x128xf32> -> vector<128x128xf32>
    %cst_42 = arith.constant 0xFF800000 : f32
    %66 = vector.shape_cast %22 : vector<128x1xi1> to vector<128x1xi1>
    %67 = vector.broadcast %66 : vector<128x1xi1> to vector<128x128xi1>
    %68 = vector.broadcast %cst_42 : f32 to vector<128x128xf32>
    %69 = arith.select %67, %65, %68 : vector<128x128xi1>, vector<128x128xf32>
    %c1 = arith.constant 1 : index
    %c0_43 = arith.constant 0 : index
    %c0_44 = arith.constant 0 : index
    %70 = vector.load %arg17[%c1, %c0_43, %c0_44] : memref<4x1x128xf32, #tpu.memory_space<vmem>>, vector<1x1x128xf32>
    %71 = vector.shape_cast %70 : vector<1x1x128xf32> to vector<1x128xf32>
    %cst_45 = arith.constant dense<0xFF800000> : vector<128xf32>
    %72 = vector.multi_reduction <maximumf>, %69, %cst_45 [0] : vector<128x128xf32> to vector<128xf32>
    %73 = vector.shape_cast %72 : vector<128xf32> to vector<1x128xf32>
    %74 = arith.maximumf %71, %73 : vector<1x128xf32>
    %75 = arith.subf %71, %74 : vector<1x128xf32>
    %76 = math.exp %75 : vector<1x128xf32>
    %77 = vector.broadcast %74 : vector<1x128xf32> to vector<128x128xf32>
    %78 = arith.subf %69, %77 : vector<128x128xf32>
    %79 = math.exp %78 : vector<128x128xf32>
    %c1_46 = arith.constant 1 : index
    %c0_47 = arith.constant 0 : index
    %c0_48 = arith.constant 0 : index
    %80 = vector.load %arg18[%c1_46, %c0_47, %c0_48] : memref<4x1x128xf32, #tpu.memory_space<vmem>>, vector<1x1x128xf32>
    %81 = vector.shape_cast %80 : vector<1x1x128xf32> to vector<1x128xf32>
    %82 = arith.mulf %76, %81 : vector<1x128xf32>
    %cst_49 = arith.constant dense<0.000000e+00> : vector<128xf32>
    %83 = vector.multi_reduction <add>, %79, %cst_49 [0] : vector<128x128xf32> to vector<128xf32>
    %84 = vector.shape_cast %83 : vector<128xf32> to vector<1x128xf32>
    %85 = arith.addf %82, %84 : vector<1x128xf32>
    %c1_50 = arith.constant 1 : index
    %c0_51 = arith.constant 0 : index
    %c0_52 = arith.constant 0 : index
    %86 = vector.load %arg18[%c1_50, %c0_51, %c0_52] : memref<4x1x128xf32, #tpu.memory_space<vmem>>, vector<1x1x128xf32>
    %87 = vector.shape_cast %86 : vector<1x1x128xf32> to vector<1x128xf32>
    %88 = vector.shape_cast %85 : vector<1x128xf32> to vector<1x1x128xf32>
    tpu.vector_store %arg18[%c1_50, %c0_51, %c0_52], %88 {strides = array<i32>} : memref<4x1x128xf32, #tpu.memory_space<vmem>>, vector<1x1x128xf32>,
    %c1_53 = arith.constant 1 : index
    %c0_54 = arith.constant 0 : index
    %c0_55 = arith.constant 0 : index
    %89 = vector.load %arg17[%c1_53, %c0_54, %c0_55] : memref<4x1x128xf32, #tpu.memory_space<vmem>>, vector<1x1x128xf32>
    %90 = vector.shape_cast %89 : vector<1x1x128xf32> to vector<1x128xf32>
    %91 = vector.shape_cast %74 : vector<1x128xf32> to vector<1x1x128xf32>
    tpu.vector_store %arg17[%c1_53, %c0_54, %c0_55], %91 {strides = array<i32>} : memref<4x1x128xf32, #tpu.memory_space<vmem>>, vector<1x1x128xf32>,
    %cst_56 = arith.constant dense<0.000000e+00> : vector<8x128xf32>
    %92 = tpu.matmul %64, %79, %cst_56 {dimension_numbers = #tpu.dot_dimension_numbers<[1], [0], [0], [1], [0, 0, 1, 1], [], []>} : vector<8x128xf32>, vector<128x128xf32>, vector<8x128xf32> -> vector<8x128xf32>
    %c1_57 = arith.constant 1 : index
    %c0_58 = arith.constant 0 : index
    %c0_59 = arith.constant 0 : index
    %93 = vector.load %arg16[%c1_57, %c0_58, %c0_59] : memref<4x8x128xf32, #tpu.memory_space<vmem>>, vector<1x8x128xf32>
    %94 = vector.shape_cast %93 : vector<1x8x128xf32> to vector<8x128xf32>
    %95 = vector.broadcast %76 : vector<1x128xf32> to vector<8x128xf32>
    %96 = arith.mulf %95, %94 : vector<8x128xf32>
    %97 = arith.addf %96, %92 : vector<8x128xf32>
    %c1_60 = arith.constant 1 : index
    %c0_61 = arith.constant 0 : index
    %c0_62 = arith.constant 0 : index
    %98 = vector.load %arg16[%c1_60, %c0_61, %c0_62] : memref<4x8x128xf32, #tpu.memory_space<vmem>>, vector<1x8x128xf32>
    %99 = vector.shape_cast %98 : vector<1x8x128xf32> to vector<8x128xf32>
    %100 = vector.shape_cast %97 : vector<8x128xf32> to vector<1x8x128xf32>
    tpu.vector_store %arg16[%c1_60, %c0_61, %c0_62], %100 {strides = array<i32>} : memref<4x8x128xf32, #tpu.memory_space<vmem>>, vector<1x8x128xf32>,
    %c16 = arith.constant 16 : index
    %c0_63 = arith.constant 0 : index
    %101 = vector.load %arg15[%c16, %c0_63] : memref<32x128xf32, #tpu.memory_space<vmem>>, vector<8x128xf32>
    %102 = vector.extract_strided_slice %11 {offsets = [16, 0], sizes = [8, 128], strides = [1, 1]} : vector<32x128xf32> to vector<8x128xf32>
    %103 = vector.extract_strided_slice %16 {offsets = [16, 0], sizes = [8, 128], strides = [1, 1]} : vector<32x128xf32> to vector<8x128xf32>
    %cst_64 = arith.constant dense<0.000000e+00> : vector<128x128xf32>
    %104 = tpu.matmul %102, %101, %cst_64 {dimension_numbers = #tpu.dot_dimension_numbers<[0], [0], [1], [1], [0, 1, 1, 1], [], []>} : vector<8x128xf32>, vector<8x128xf32>, vector<128x128xf32> -> vector<128x128xf32>
    %cst_65 = arith.constant 0xFF800000 : f32
    %105 = vector.shape_cast %22 : vector<128x1xi1> to vector<128x1xi1>
    %106 = vector.broadcast %105 : vector<128x1xi1> to vector<128x128xi1>
    %107 = vector.broadcast %cst_65 : f32 to vector<128x128xf32>
    %108 = arith.select %106, %104, %107 : vector<128x128xi1>, vector<128x128xf32>
    %c2 = arith.constant 2 : index
    %c0_66 = arith.constant 0 : index
    %c0_67 = arith.constant 0 : index
    %109 = vector.load %arg17[%c2, %c0_66, %c0_67] : memref<4x1x128xf32, #tpu.memory_space<vmem>>, vector<1x1x128xf32>
    %110 = vector.shape_cast %109 : vector<1x1x128xf32> to vector<1x128xf32>
    %cst_68 = arith.constant dense<0xFF800000> : vector<128xf32>
    %111 = vector.multi_reduction <maximumf>, %108, %cst_68 [0] : vector<128x128xf32> to vector<128xf32>
    %112 = vector.shape_cast %111 : vector<128xf32> to vector<1x128xf32>
    %113 = arith.maximumf %110, %112 : vector<1x128xf32>
    %114 = arith.subf %110, %113 : vector<1x128xf32>
    %115 = math.exp %114 : vector<1x128xf32>
    %116 = vector.broadcast %113 : vector<1x128xf32> to vector<128x128xf32>
    %117 = arith.subf %108, %116 : vector<128x128xf32>
    %118 = math.exp %117 : vector<128x128xf32>
    %c2_69 = arith.constant 2 : index
    %c0_70 = arith.constant 0 : index
    %c0_71 = arith.constant 0 : index
    %119 = vector.load %arg18[%c2_69, %c0_70, %c0_71] : memref<4x1x128xf32, #tpu.memory_space<vmem>>, vector<1x1x128xf32>
    %120 = vector.shape_cast %119 : vector<1x1x128xf32> to vector<1x128xf32>
    %121 = arith.mulf %115, %120 : vector<1x128xf32>
    %cst_72 = arith.constant dense<0.000000e+00> : vector<128xf32>
    %122 = vector.multi_reduction <add>, %118, %cst_72 [0] : vector<128x128xf32> to vector<128xf32>
    %123 = vector.shape_cast %122 : vector<128xf32> to vector<1x128xf32>
    %124 = arith.addf %121, %123 : vector<1x128xf32>
    %c2_73 = arith.constant 2 : index
    %c0_74 = arith.constant 0 : index
    %c0_75 = arith.constant 0 : index
    %125 = vector.load %arg18[%c2_73, %c0_74, %c0_75] : memref<4x1x128xf32, #tpu.memory_space<vmem>>, vector<1x1x128xf32>
    %126 = vector.shape_cast %125 : vector<1x1x128xf32> to vector<1x128xf32>
    %127 = vector.shape_cast %124 : vector<1x128xf32> to vector<1x1x128xf32>
    tpu.vector_store %arg18[%c2_73, %c0_74, %c0_75], %127 {strides = array<i32>} : memref<4x1x128xf32, #tpu.memory_space<vmem>>, vector<1x1x128xf32>,
    %c2_76 = arith.constant 2 : index
    %c0_77 = arith.constant 0 : index
    %c0_78 = arith.constant 0 : index
    %128 = vector.load %arg17[%c2_76, %c0_77, %c0_78] : memref<4x1x128xf32, #tpu.memory_space<vmem>>, vector<1x1x128xf32>
    %129 = vector.shape_cast %128 : vector<1x1x128xf32> to vector<1x128xf32>
    %130 = vector.shape_cast %113 : vector<1x128xf32> to vector<1x1x128xf32>
    tpu.vector_store %arg17[%c2_76, %c0_77, %c0_78], %130 {strides = array<i32>} : memref<4x1x128xf32, #tpu.memory_space<vmem>>, vector<1x1x128xf32>,
    %cst_79 = arith.constant dense<0.000000e+00> : vector<8x128xf32>
    %131 = tpu.matmul %103, %118, %cst_79 {dimension_numbers = #tpu.dot_dimension_numbers<[1], [0], [0], [1], [0, 0, 1, 1], [], []>} : vector<8x128xf32>, vector<128x128xf32>, vector<8x128xf32> -> vector<8x128xf32>
    %c2_80 = arith.constant 2 : index
    %c0_81 = arith.constant 0 : index
    %c0_82 = arith.constant 0 : index
    %132 = vector.load %arg16[%c2_80, %c0_81, %c0_82] : memref<4x8x128xf32, #tpu.memory_space<vmem>>, vector<1x8x128xf32>
    %133 = vector.shape_cast %132 : vector<1x8x128xf32> to vector<8x128xf32>
    %134 = vector.broadcast %115 : vector<1x128xf32> to vector<8x128xf32>
    %135 = arith.mulf %134, %133 : vector<8x128xf32>
    %136 = arith.addf %135, %131 : vector<8x128xf32>
    %c2_83 = arith.constant 2 : index
    %c0_84 = arith.constant 0 : index
    %c0_85 = arith.constant 0 : index
    %137 = vector.load %arg16[%c2_83, %c0_84, %c0_85] : memref<4x8x128xf32, #tpu.memory_space<vmem>>, vector<1x8x128xf32>
    %138 = vector.shape_cast %137 : vector<1x8x128xf32> to vector<8x128xf32>
    %139 = vector.shape_cast %136 : vector<8x128xf32> to vector<1x8x128xf32>
    tpu.vector_store %arg16[%c2_83, %c0_84, %c0_85], %139 {strides = array<i32>} : memref<4x8x128xf32, #tpu.memory_space<vmem>>, vector<1x8x128xf32>,
    %c24 = arith.constant 24 : index
    %c0_86 = arith.constant 0 : index
    %140 = vector.load %arg15[%c24, %c0_86] : memref<32x128xf32, #tpu.memory_space<vmem>>, vector<8x128xf32>
    %141 = vector.extract_strided_slice %11 {offsets = [24, 0], sizes = [8, 128], strides = [1, 1]} : vector<32x128xf32> to vector<8x128xf32>
    %142 = vector.extract_strided_slice %16 {offsets = [24, 0], sizes = [8, 128], strides = [1, 1]} : vector<32x128xf32> to vector<8x128xf32>
    %cst_87 = arith.constant dense<0.000000e+00> : vector<128x128xf32>
    %143 = tpu.matmul %141, %140, %cst_87 {dimension_numbers = #tpu.dot_dimension_numbers<[0], [0], [1], [1], [0, 1, 1, 1], [], []>} : vector<8x128xf32>, vector<8x128xf32>, vector<128x128xf32> -> vector<128x128xf32>
    %cst_88 = arith.constant 0xFF800000 : f32
    %144 = vector.shape_cast %22 : vector<128x1xi1> to vector<128x1xi1>
    %145 = vector.broadcast %144 : vector<128x1xi1> to vector<128x128xi1>
    %146 = vector.broadcast %cst_88 : f32 to vector<128x128xf32>
    %147 = arith.select %145, %143, %146 : vector<128x128xi1>, vector<128x128xf32>
    %c3 = arith.constant 3 : index
    %c0_89 = arith.constant 0 : index
    %c0_90 = arith.constant 0 : index
    %148 = vector.load %arg17[%c3, %c0_89, %c0_90] : memref<4x1x128xf32, #tpu.memory_space<vmem>>, vector<1x1x128xf32>
    %149 = vector.shape_cast %148 : vector<1x1x128xf32> to vector<1x128xf32>
    %cst_91 = arith.constant dense<0xFF800000> : vector<128xf32>
    %150 = vector.multi_reduction <maximumf>, %147, %cst_91 [0] : vector<128x128xf32> to vector<128xf32>
    %151 = vector.shape_cast %150 : vector<128xf32> to vector<1x128xf32>
    %152 = arith.maximumf %149, %151 : vector<1x128xf32>
    %153 = arith.subf %149, %152 : vector<1x128xf32>
    %154 = math.exp %153 : vector<1x128xf32>
    %155 = vector.broadcast %152 : vector<1x128xf32> to vector<128x128xf32>
    %156 = arith.subf %147, %155 : vector<128x128xf32>
    %157 = math.exp %156 : vector<128x128xf32>
    %c3_92 = arith.constant 3 : index
    %c0_93 = arith.constant 0 : index
    %c0_94 = arith.constant 0 : index
    %158 = vector.load %arg18[%c3_92, %c0_93, %c0_94] : memref<4x1x128xf32, #tpu.memory_space<vmem>>, vector<1x1x128xf32>
    %159 = vector.shape_cast %158 : vector<1x1x128xf32> to vector<1x128xf32>
    %160 = arith.mulf %154, %159 : vector<1x128xf32>
    %cst_95 = arith.constant dense<0.000000e+00> : vector<128xf32>
    %161 = vector.multi_reduction <add>, %157, %cst_95 [0] : vector<128x128xf32> to vector<128xf32>
    %162 = vector.shape_cast %161 : vector<128xf32> to vector<1x128xf32>
    %163 = arith.addf %160, %162 : vector<1x128xf32>
    %c3_96 = arith.constant 3 : index
    %c0_97 = arith.constant 0 : index
    %c0_98 = arith.constant 0 : index
    %164 = vector.load %arg18[%c3_96, %c0_97, %c0_98] : memref<4x1x128xf32, #tpu.memory_space<vmem>>, vector<1x1x128xf32>
    %165 = vector.shape_cast %164 : vector<1x1x128xf32> to vector<1x128xf32>
    %166 = vector.shape_cast %163 : vector<1x128xf32> to vector<1x1x128xf32>
    tpu.vector_store %arg18[%c3_96, %c0_97, %c0_98], %166 {strides = array<i32>} : memref<4x1x128xf32, #tpu.memory_space<vmem>>, vector<1x1x128xf32>,
    %c3_99 = arith.constant 3 : index
    %c0_100 = arith.constant 0 : index
    %c0_101 = arith.constant 0 : index
    %167 = vector.load %arg17[%c3_99, %c0_100, %c0_101] : memref<4x1x128xf32, #tpu.memory_space<vmem>>, vector<1x1x128xf32>
    %168 = vector.shape_cast %167 : vector<1x1x128xf32> to vector<1x128xf32>
    %169 = vector.shape_cast %152 : vector<1x128xf32> to vector<1x1x128xf32>
    tpu.vector_store %arg17[%c3_99, %c0_100, %c0_101], %169 {strides = array<i32>} : memref<4x1x128xf32, #tpu.memory_space<vmem>>, vector<1x1x128xf32>,
    %cst_102 = arith.constant dense<0.000000e+00> : vector<8x128xf32>
    %170 = tpu.matmul %142, %157, %cst_102 {dimension_numbers = #tpu.dot_dimension_numbers<[1], [0], [0], [1], [0, 0, 1, 1], [], []>} : vector<8x128xf32>, vector<128x128xf32>, vector<8x128xf32> -> vector<8x128xf32>
    %c3_103 = arith.constant 3 : index
    %c0_104 = arith.constant 0 : index
    %c0_105 = arith.constant 0 : index
    %171 = vector.load %arg16[%c3_103, %c0_104, %c0_105] : memref<4x8x128xf32, #tpu.memory_space<vmem>>, vector<1x8x128xf32>
    %172 = vector.shape_cast %171 : vector<1x8x128xf32> to vector<8x128xf32>
    %173 = vector.broadcast %154 : vector<1x128xf32> to vector<8x128xf32>
    %174 = arith.mulf %173, %172 : vector<8x128xf32>
    %175 = arith.addf %174, %170 : vector<8x128xf32>
    %c3_106 = arith.constant 3 : index
    %c0_107 = arith.constant 0 : index
    %c0_108 = arith.constant 0 : index
    %176 = vector.load %arg16[%c3_106, %c0_107, %c0_108] : memref<4x8x128xf32, #tpu.memory_space<vmem>>, vector<1x8x128xf32>
    %177 = vector.shape_cast %176 : vector<1x8x128xf32> to vector<8x128xf32>
    %178 = vector.shape_cast %175 : vector<8x128xf32> to vector<1x8x128xf32>
    tpu.vector_store %arg16[%c3_106, %c0_107, %c0_108], %178 {strides = array<i32>} : memref<4x8x128xf32, #tpu.memory_space<vmem>>, vector<1x8x128xf32>,
    %c0_i32_109 = arith.constant 0 : i32
    %179 = arith.cmpi eq, %arg2, %c0_i32_109 : i32
    %180 = arith.extui %179 : i1 to i32
    %c0_i32_110 = arith.constant 0 : i32
    %181 = arith.cmpi ne, %180, %c0_i32_110 : i32
    scf.if %181 {
      %c0_111 = arith.constant 0 : index
      %c0_112 = arith.constant 0 : index
      %182 = vector.load %arg12[%c0_111, %c0_112] : memref<32x32xf32, #tpu.memory_space<vmem>>, vector<32x32xf32>
      %c0_113 = arith.constant 0 : index
      %c0_114 = arith.constant 0 : index
      %183 = vector.load %arg13[%c0_113, %c0_114] : memref<32x1xf32, #tpu.memory_space<vmem>>, vector<32x1xf32>
      %c0_115 = arith.constant 0 : index
      %c0_116 = arith.constant 0 : index
      %c0_117 = arith.constant 0 : index
      %184 = vector.load %arg18[%c0_115, %c0_116, %c0_117] : memref<4x1x128xf32, #tpu.memory_space<vmem>>, vector<1x1x128xf32>
      %185 = vector.shape_cast %184 : vector<1x1x128xf32> to vector<1x128xf32>
      %186 = tpu.reciprocal %185 : vector<1x128xf32> -> vector<1x128xf32>
      %c0_118 = arith.constant 0 : index
      %c0_119 = arith.constant 0 : index
      %c0_120 = arith.constant 0 : index
      %187 = vector.load %arg16[%c0_118, %c0_119, %c0_120] : memref<4x8x128xf32, #tpu.memory_space<vmem>>, vector<1x8x128xf32>
      %188 = vector.shape_cast %187 : vector<1x8x128xf32> to vector<8x128xf32>
      %189 = vector.broadcast %186 : vector<1x128xf32> to vector<8x128xf32>
      %190 = arith.mulf %188, %189 : vector<8x128xf32>
      %191 = vector.extract_strided_slice %182 {offsets = [0, 0], sizes = [32, 8], strides = [1, 1]} : vector<32x32xf32> to vector<32x8xf32>
      %cst_121 = arith.constant dense<0.000000e+00> : vector<32x128xf32>
      %192 = tpu.matmul %191, %190, %cst_121 {dimension_numbers = #tpu.dot_dimension_numbers<[1], [0], [0], [1], [0, 0, 1, 1], [], []>} : vector<32x8xf32>, vector<8x128xf32>, vector<32x128xf32> -> vector<32x128xf32>
      %193 = vector.broadcast %183 : vector<32x1xf32> to vector<32x128xf32>
      %194 = arith.addf %193, %192 : vector<32x128xf32>
      %c1_122 = arith.constant 1 : index
      %c0_123 = arith.constant 0 : index
      %c0_124 = arith.constant 0 : index
      %195 = vector.load %arg18[%c1_122, %c0_123, %c0_124] : memref<4x1x128xf32, #tpu.memory_space<vmem>>, vector<1x1x128xf32>
      %196 = vector.shape_cast %195 : vector<1x1x128xf32> to vector<1x128xf32>
      %197 = tpu.reciprocal %196 : vector<1x128xf32> -> vector<1x128xf32>
      %c1_125 = arith.constant 1 : index
      %c0_126 = arith.constant 0 : index
      %c0_127 = arith.constant 0 : index
      %198 = vector.load %arg16[%c1_125, %c0_126, %c0_127] : memref<4x8x128xf32, #tpu.memory_space<vmem>>, vector<1x8x128xf32>
      %199 = vector.shape_cast %198 : vector<1x8x128xf32> to vector<8x128xf32>
      %200 = vector.broadcast %197 : vector<1x128xf32> to vector<8x128xf32>
      %201 = arith.mulf %199, %200 : vector<8x128xf32>
      %202 = vector.extract_strided_slice %182 {offsets = [0, 8], sizes = [32, 8], strides = [1, 1]} : vector<32x32xf32> to vector<32x8xf32>
      %cst_128 = arith.constant dense<0.000000e+00> : vector<32x128xf32>
      %203 = tpu.matmul %202, %201, %cst_128 {dimension_numbers = #tpu.dot_dimension_numbers<[1], [0], [0], [1], [0, 0, 1, 1], [], []>} : vector<32x8xf32>, vector<8x128xf32>, vector<32x128xf32> -> vector<32x128xf32>
      %204 = arith.addf %194, %203 : vector<32x128xf32>
      %c2_129 = arith.constant 2 : index
      %c0_130 = arith.constant 0 : index
      %c0_131 = arith.constant 0 : index
      %205 = vector.load %arg18[%c2_129, %c0_130, %c0_131] : memref<4x1x128xf32, #tpu.memory_space<vmem>>, vector<1x1x128xf32>
      %206 = vector.shape_cast %205 : vector<1x1x128xf32> to vector<1x128xf32>
      %207 = tpu.reciprocal %206 : vector<1x128xf32> -> vector<1x128xf32>
      %c2_132 = arith.constant 2 : index
      %c0_133 = arith.constant 0 : index
      %c0_134 = arith.constant 0 : index
      %208 = vector.load %arg16[%c2_132, %c0_133, %c0_134] : memref<4x8x128xf32, #tpu.memory_space<vmem>>, vector<1x8x128xf32>
      %209 = vector.shape_cast %208 : vector<1x8x128xf32> to vector<8x128xf32>
      %210 = vector.broadcast %207 : vector<1x128xf32> to vector<8x128xf32>
      %211 = arith.mulf %209, %210 : vector<8x128xf32>
      %212 = vector.extract_strided_slice %182 {offsets = [0, 16], sizes = [32, 8], strides = [1, 1]} : vector<32x32xf32> to vector<32x8xf32>
      %cst_135 = arith.constant dense<0.000000e+00> : vector<32x128xf32>
      %213 = tpu.matmul %212, %211, %cst_135 {dimension_numbers = #tpu.dot_dimension_numbers<[1], [0], [0], [1], [0, 0, 1, 1], [], []>} : vector<32x8xf32>, vector<8x128xf32>, vector<32x128xf32> -> vector<32x128xf32>
      %214 = arith.addf %204, %213 : vector<32x128xf32>
      %c3_136 = arith.constant 3 : index
      %c0_137 = arith.constant 0 : index
      %c0_138 = arith.constant 0 : index
      %215 = vector.load %arg18[%c3_136, %c0_137, %c0_138] : memref<4x1x128xf32, #tpu.memory_space<vmem>>, vector<1x1x128xf32>
      %216 = vector.shape_cast %215 : vector<1x1x128xf32> to vector<1x128xf32>
      %217 = tpu.reciprocal %216 : vector<1x128xf32> -> vector<1x128xf32>
      %c3_139 = arith.constant 3 : index
      %c0_140 = arith.constant 0 : index
      %c0_141 = arith.constant 0 : index
      %218 = vector.load %arg16[%c3_139, %c0_140, %c0_141] : memref<4x8x128xf32, #tpu.memory_space<vmem>>, vector<1x8x128xf32>
      %219 = vector.shape_cast %218 : vector<1x8x128xf32> to vector<8x128xf32>
      %220 = vector.broadcast %217 : vector<1x128xf32> to vector<8x128xf32>
      %221 = arith.mulf %219, %220 : vector<8x128xf32>
      %222 = vector.extract_strided_slice %182 {offsets = [0, 24], sizes = [32, 8], strides = [1, 1]} : vector<32x32xf32> to vector<32x8xf32>
      %cst_142 = arith.constant dense<0.000000e+00> : vector<32x128xf32>
      %223 = tpu.matmul %222, %221, %cst_142 {dimension_numbers = #tpu.dot_dimension_numbers<[1], [0], [0], [1], [0, 0, 1, 1], [], []>} : vector<32x8xf32>, vector<8x128xf32>, vector<32x128xf32> -> vector<32x128xf32>
      %224 = arith.addf %214, %223 : vector<32x128xf32>
      %c0_143 = arith.constant 0 : index
      %c0_144 = arith.constant 0 : index
      %c0_145 = arith.constant 0 : index
      %225 = vector.load %arg14[%c0_143, %c0_144, %c0_145] : memref<1x32x128xf32, #tpu.memory_space<vmem>>, vector<1x32x128xf32>
      %226 = vector.shape_cast %225 : vector<1x32x128xf32> to vector<32x128xf32>
      %227 = vector.shape_cast %224 : vector<32x128xf32> to vector<1x32x128xf32>
      tpu.vector_store %arg14[%c0_143, %c0_144, %c0_145], %227 {strides = array<i32>} : memref<1x32x128xf32, #tpu.memory_space<vmem>>, vector<1x32x128xf32>,
    } else {
    }
    return
  }
  func.func @transform_0(%arg0: i32, %arg1: i32, %arg2: i32) -> (i32, i32, i32) {
    %c0_i32 = arith.constant 0 : i32
    %c0_i32_0 = arith.constant 0 : i32
    return %arg0, %c0_i32, %arg1 : i32, i32, i32
  }
  func.func @transform_1(%arg0: i32, %arg1: i32, %arg2: i32) -> (i32, i32, i32) {
    %c0_i32 = arith.constant 0 : i32
    %c0_i32_0 = arith.constant 0 : i32
    return %arg0, %c0_i32, %arg2 : i32, i32, i32
  }
  func.func @transform_2(%arg0: i32, %arg1: i32, %arg2: i32) -> (i32, i32, i32) {
    %c0_i32 = arith.constant 0 : i32
    %c0_i32_0 = arith.constant 0 : i32
    return %arg0, %c0_i32, %arg2 : i32, i32, i32
  }
  func.func @transform_3(%arg0: i32, %arg1: i32, %arg2: i32) -> (i32, i32) {
    %c0_i32 = arith.constant 0 : i32
    %c0_i32_0 = arith.constant 0 : i32
    %c0_i32_1 = arith.constant 0 : i32
    return %c0_i32, %c0_i32_0 : i32, i32
  }
  func.func @transform_4(%arg0: i32, %arg1: i32, %arg2: i32) -> (i32, i32) {
    %c0_i32 = arith.constant 0 : i32
    %c0_i32_0 = arith.constant 0 : i32
    %c0_i32_1 = arith.constant 0 : i32
    return %c0_i32, %c0_i32_0 : i32, i32
  }
  func.func @transform_5(%arg0: i32, %arg1: i32, %arg2: i32) -> (i32, i32) {
    %c0_i32 = arith.constant 0 : i32
    %c0_i32_0 = arith.constant 0 : i32
    %c0_i32_1 = arith.constant 0 : i32
    return %c0_i32, %c0_i32_0 : i32, i32
  }
  func.func @transform_6(%arg0: i32, %arg1: i32, %arg2: i32) -> (i32, i32) {
    %c0_i32 = arith.constant 0 : i32
    %c0_i32_0 = arith.constant 0 : i32
    %c0_i32_1 = arith.constant 0 : i32
    return %c0_i32, %c0_i32_0 : i32, i32
  }
  func.func @transform_7(%arg0: i32, %arg1: i32, %arg2: i32) -> (i32, i32) {
    %c0_i32 = arith.constant 0 : i32
    %c0_i32_0 = arith.constant 0 : i32
    %c0_i32_1 = arith.constant 0 : i32
    return %c0_i32, %c0_i32_0 : i32, i32
  }
  func.func @transform_8(%arg0: i32, %arg1: i32, %arg2: i32) -> (i32, i32) {
    %c0_i32 = arith.constant 0 : i32
    %c0_i32_0 = arith.constant 0 : i32
    %c0_i32_1 = arith.constant 0 : i32
    return %c0_i32, %c0_i32_0 : i32, i32
  }
  func.func @transform_9(%arg0: i32, %arg1: i32, %arg2: i32) -> (i32, i32) {
    %c0_i32 = arith.constant 0 : i32
    %c0_i32_0 = arith.constant 0 : i32
    %c0_i32_1 = arith.constant 0 : i32
    return %c0_i32, %c0_i32_0 : i32, i32
  }
  func.func @transform_10(%arg0: i32, %arg1: i32, %arg2: i32) -> (i32, i32) {
    %c0_i32 = arith.constant 0 : i32
    %c0_i32_0 = arith.constant 0 : i32
    %c0_i32_1 = arith.constant 0 : i32
    return %c0_i32, %c0_i32_0 : i32, i32
  }
  func.func @transform_11(%arg0: i32, %arg1: i32, %arg2: i32) -> (i32, i32, i32) {
    %c0_i32 = arith.constant 0 : i32
    %c0_i32_0 = arith.constant 0 : i32
    return %arg0, %c0_i32, %arg1 : i32, i32, i32
  }
}

</mosaic_0001>

<llo_original>
// kernel: tpu_custom_call.1
$region0: #{tpu_custom_call.1}
  #allocation0 [shape = 'u32[]', space=smem, size = 0x4, offset = 0x4, fixed_abs, tag = 'smem constant byte address 0x4 - core index']
  #allocation1 [shape = 'u32[72,128]{1,0:T(1,128)}', space=vmem, size = 0x9000, scoped, tag = 'internal scratch']
  #allocation2 [shape = 'f32[32,128]{1,0:T(8,128)}', space=vmem, size = 0x4000, scoped, tag = 'scratch operand']
  #allocation3 [shape = 'f32[4,8,128]{2,1,0:T(8,128)}', space=vmem, size = 0x4000, scoped, tag = 'scratch operand']
  #allocation4 [shape = 'f32[4,1,128]{2,1,0:T(1,128)}', space=vmem, size = 0x800, scoped, tag = 'scratch operand']
  #allocation5 [shape = 'f32[4,1,128]{2,1,0:T(1,128)}', space=vmem, size = 0x800, scoped, tag = 'scratch operand']
  %s0 = inlined_call_operand.vmem [shape: f32[2,32,128], index: 0, kind: input, shape index: {}]
  %s1 = inlined_call_operand.vmem [shape: f32[2,32,128], index: 1, kind: input, shape index: {}]
  %s2 = inlined_call_operand.hbm [shape: f32[2,32,128], index: 2, kind: input, shape index: {}]
  %s3 = inlined_call_operand.hbm [shape: f32[32,32], index: 3, kind: input, shape index: {}]
  %s4 = inlined_call_operand.vmem [shape: f32[32,1], index: 4, kind: input, shape index: {}]
  %s5 = inlined_call_operand.hbm [shape: f32[32,32], index: 5, kind: input, shape index: {}]
  %s6 = inlined_call_operand.vmem [shape: f32[32,1], index: 6, kind: input, shape index: {}]
  %s7 = inlined_call_operand.hbm [shape: f32[32,32], index: 7, kind: input, shape index: {}]
  %s8 = inlined_call_operand.vmem [shape: f32[32,1], index: 8, kind: input, shape index: {}]
  %s9 = inlined_call_operand.hbm [shape: f32[32,32], index: 9, kind: input, shape index: {}]
  %s10 = inlined_call_operand.vmem [shape: f32[32,1], index: 10, kind: input, shape index: {}]
  %s11 = inlined_call_operand.hbm [shape: f32[2,32,128], index: 11, kind: output, shape index: {}]
  %s12 = sld [smem:[#allocation0]]
  $region105: #{tpu_custom_call.1} parent=0
    _
  %s14 = ssub.s32 1, %s12
  %s15 = scalar_select 0, %s14, %s12
  $region1: #{tpu_custom_call.1} parent=0
    #allocation6 [shape = 'u8[32768]{0}', space=vmem, size = 0x8000, scoped, tag = 'input window, operand 2']
    #allocation7 [shape = 's32[2]{0}', space=sflag, size = 0x8, scoped, tag = 'scoped memory for tpu_custom_call.1']
    #allocation8 [shape = 's32[2]{0}', space=sflag, size = 0x8, scoped, tag = 'scoped memory for tpu_custom_call.1']
    #allocation9 [shape = 'u8[16384]{0}', space=vmem, size = 0x4000, scoped, tag = 'input window, operand 3, single buffered']
    #allocation10 [shape = 's32[1]{0}', space=sflag, size = 0x4, scoped, tag = 'scoped memory for tpu_custom_call.1']
    #allocation11 [shape = 'u8[16384]{0}', space=vmem, size = 0x4000, scoped, tag = 'input window, operand 5, single buffered']
    #allocation12 [shape = 'u8[16384]{0}', space=vmem, size = 0x4000, scoped, tag = 'input window, operand 7, single buffered']
    #allocation13 [shape = 's32[1]{0}', space=sflag, size = 0x4, scoped, tag = 'scoped memory for tpu_custom_call.1']
    #allocation14 [shape = 'u8[16384]{0}', space=vmem, size = 0x4000, scoped, tag = 'input window, operand 9, single buffered']
    #allocation15 [shape = 'u8[32768]{0}', space=vmem, size = 0x8000, scoped, tag = 'output window, operand 0']
    %16 = vsyncpa [#allocation7], 0
    %s17 = scalar_lea.sflag [#allocation7], 1
    %18 = vsyncpa %s17, 0
    %19 = vsyncpa [#allocation10], 0
    %20 = vsyncpa [#allocation13], 0
    %21 = vsyncpa [#allocation8], 0
    %s22 = scalar_lea.sflag [#allocation8], 1
    %23 = vsyncpa %s22, 0
    loop: start=0, step=1, limit=4
    $region2: #{tpu_custom_call.1} parent=1 // loop_pre_header
      _
    $region3: #{tpu_custom_call.1} parent=1 // loop_header
      %s25 = sphi 0, %s29
      %p26 = scmp.ge.s32.totalorder %s25, 4
      %s32 = sphi 0, %s51
      %s33 = sphi 0, %s47
      %s34 = sphi 0, %s43
      %s35 = sphi 0, %s32
      %s36 = sphi 0, %s33
      %s37 = sphi 0, %s34
      %s38 = sphi 0, %s35
      %s39 = sphi 0, %s36
      %s40 = sphi 0, %s37
      %s56 = sphi 0, %s58
      %s59 = sphi 0, %s56
      %s60 = sphi 0, %s59
      %s76 = sphi 0, %s60
      %s84 = sphi 0, %s86
      %s87 = sphi 0, %s84
      %s88 = sphi 0, %s87
      %s104 = sphi 0, %s88
      %s112 = sphi 0, %s114
      %s115 = sphi 0, %s112
      %s116 = sphi 0, %s115
      %s132 = sphi 0, %s116
      %s136 = sphi 0, %s136
      %s138 = sphi 0, %s136
      %s139 = sphi 0, %s138
      %s153 = sphi 0, %s139
      %s157 = sphi 0, %s157
      %s159 = sphi 0, %s157
      %s160 = sphi 0, %s159
      %s174 = sphi 0, %s160
      %s178 = sphi 0, %s178
      %s180 = sphi 0, %s178
      %s181 = sphi 0, %s180
      %s195 = sphi 0, %s181
      %s199 = sphi 0, %s199
      %s201 = sphi 0, %s199
      %s202 = sphi 0, %s201
      %s216 = sphi 0, %s202
      %s220 = sphi 0, %s220
      %s222 = sphi 0, %s220
      %s223 = sphi 0, %s222
      %s237 = sphi 0, %s223
      %s241 = sphi 0, %s241
      %s243 = sphi 0, %s241
      %s244 = sphi 0, %s243
      %s258 = sphi 0, %s244
      %s262 = sphi 0, %s262
      %s264 = sphi 0, %s262
      %s265 = sphi 0, %s264
      %s279 = sphi 0, %s265
      %s283 = sphi 0, %s283
      %s285 = sphi 0, %s283
      %s286 = sphi 0, %s285
      %s300 = sphi 0, %s286
      %s308 = sphi 0, %s310
      %s311 = sphi 0, %s308
      %s312 = sphi 0, %s311
      %s328 = sphi 0, %s312
    $region4: #{tpu_custom_call.1} parent=1 // loop_header_branch
      %28 = sbr.rel (%p26) target = $region8
    $region5: #{tpu_custom_call.1} parent=1 // loop_body
      %s30 = ssub.s32 %s25, 1
      %s31 = ssub.s32 %s25, 2
      %s41 = sadd.s32 1, %s34
      %p42 = scmp.ge.s32.totalorder %s41, 1
      %s43 = scalar_select %p42, 0, %s41
      %s44 = sadd.s32 1, %s33
      %s45 = scalar_select %p42, %s44, %s33
      %p46 = scmp.ge.s32.totalorder %s45, 1
      %s47 = scalar_select %p46, 0, %s45
      %s48 = sadd.s32 1, %s32
      %s49 = scalar_select %p46, %s48, %s32
      %p50 = scmp.ge.s32.totalorder %s49, 2
      %s51 = scalar_select %p50, 0, %s49
      %s52 = ssub.s32 %s32, %s51
      %s53 = ssub.s32 %s33, %s47
      %s54 = sor.u32 %s52, %s53
      %p55 = scmp.eq.s32.totalorder %s54, 0
      %s57 = sadd.s32 %s56, 1
      %s58 = scalar_select %p55, %s56, %s57
      %p61 = pneg %p55
      %p62 = scmp.eq.s32.totalorder %s25, 1
      %p63 = por %p61, %p62
      %p64 = scmp.ne.s32.totalorder %s56, %s59
      %p65 = scmp.eq.s32.totalorder %s25, 0
      %p66 = por %p64, %p65
      %p67 = scmp.ne.s32.totalorder %s56, %s59
      %p68 = scmp.eq.s32.totalorder %s30, 1
      %p69 = por %p67, %p68
      %p70 = scmp.ne.s32.totalorder %s59, %s60
      %p71 = scmp.eq.s32.totalorder %s30, 0
      %p72 = por %p70, %p71
      %p73 = scmp.ne.s32.totalorder %s59, %s60
      %p74 = scmp.eq.s32.totalorder %s31, 1
      %p75 = por %p73, %p74
      %p77 = scmp.ne.s32.totalorder %s60, %s76
      %p78 = scmp.eq.s32.totalorder %s31, 0
      %p79 = por %p77, %p78
      %s80 = ssub.s32 %s32, %s51
      %s81 = ssub.s32 %s34, %s43
      %s82 = sor.u32 %s80, %s81
      %p83 = scmp.eq.s32.totalorder %s82, 0
      %s85 = sadd.s32 %s84, 1
      %s86 = scalar_select %p83, %s84, %s85
      %p89 = pneg %p83
      %p90 = scmp.eq.s32.totalorder %s25, 1
      %p91 = por %p89, %p90
      %p92 = scmp.ne.s32.totalorder %s84, %s87
      %p93 = scmp.eq.s32.totalorder %s25, 0
      %p94 = por %p92, %p93
      %p95 = scmp.ne.s32.totalorder %s84, %s87
      %p96 = scmp.eq.s32.totalorder %s30, 1
      %p97 = por %p95, %p96
      %p98 = scmp.ne.s32.totalorder %s87, %s88
      %p99 = scmp.eq.s32.totalorder %s30, 0
      %p100 = por %p98, %p99
      %p101 = scmp.ne.s32.totalorder %s87, %s88
      %p102 = scmp.eq.s32.totalorder %s31, 1
      %p103 = por %p101, %p102
      %p105 = scmp.ne.s32.totalorder %s88, %s104
      %p106 = scmp.eq.s32.totalorder %s31, 0
      %p107 = por %p105, %p106
      %s108 = ssub.s32 %s32, %s51
      %s109 = ssub.s32 %s34, %s43
      %s110 = sor.u32 %s108, %s109
      %p111 = scmp.eq.s32.totalorder %s110, 0
      %s113 = sadd.s32 %s112, 1
      %s114 = scalar_select %p111, %s112, %s113
      %p117 = pneg %p111
      %p118 = scmp.eq.s32.totalorder %s25, 1
      %p119 = por %p117, %p118
      %p120 = scmp.ne.s32.totalorder %s112, %s115
      %p121 = scmp.eq.s32.totalorder %s25, 0
      %p122 = por %p120, %p121
      %p123 = scmp.ne.s32.totalorder %s112, %s115
      %p124 = scmp.eq.s32.totalorder %s30, 1
      %p125 = por %p123, %p124
      %p126 = scmp.ne.s32.totalorder %s115, %s116
      %p127 = scmp.eq.s32.totalorder %s30, 0
      %p128 = por %p126, %p127
      %p129 = scmp.ne.s32.totalorder %s115, %s116
      %p130 = scmp.eq.s32.totalorder %s31, 1
      %p131 = por %p129, %p130
      %p133 = scmp.ne.s32.totalorder %s116, %s132
      %p134 = scmp.eq.s32.totalorder %s31, 0
      %p135 = por %p133, %p134
      %s137 = sadd.s32 %s136, 1
      %p140 = scmp.eq.s32.totalorder %s25, 1
      %p141 = scmp.ne.s32.totalorder %s136, %s138
      %p142 = scmp.eq.s32.totalorder %s25, 0
      %p143 = por %p141, %p142
      %p144 = scmp.ne.s32.totalorder %s136, %s138
      %p145 = scmp.eq.s32.totalorder %s30, 1
      %p146 = por %p144, %p145
      %p147 = scmp.ne.s32.totalorder %s138, %s139
      %p148 = scmp.eq.s32.totalorder %s30, 0
      %p149 = por %p147, %p148
      %p150 = scmp.ne.s32.totalorder %s138, %s139
      %p151 = scmp.eq.s32.totalorder %s31, 1
      %p152 = por %p150, %p151
      %p154 = scmp.ne.s32.totalorder %s139, %s153
      %p155 = scmp.eq.s32.totalorder %s31, 0
      %p156 = por %p154, %p155
      %s158 = sadd.s32 %s157, 1
      %p161 = scmp.eq.s32.totalorder %s25, 1
      %p162 = scmp.ne.s32.totalorder %s157, %s159
      %p163 = scmp.eq.s32.totalorder %s25, 0
      %p164 = por %p162, %p163
      %p165 = scmp.ne.s32.totalorder %s157, %s159
      %p166 = scmp.eq.s32.totalorder %s30, 1
      %p167 = por %p165, %p166
      %p168 = scmp.ne.s32.totalorder %s159, %s160
      %p169 = scmp.eq.s32.totalorder %s30, 0
      %p170 = por %p168, %p169
      %p171 = scmp.ne.s32.totalorder %s159, %s160
      %p172 = scmp.eq.s32.totalorder %s31, 1
      %p173 = por %p171, %p172
      %p175 = scmp.ne.s32.totalorder %s160, %s174
      %p176 = scmp.eq.s32.totalorder %s31, 0
      %p177 = por %p175, %p176
      %s179 = sadd.s32 %s178, 1
      %p182 = scmp.eq.s32.totalorder %s25, 1
      %p183 = scmp.ne.s32.totalorder %s178, %s180
      %p184 = scmp.eq.s32.totalorder %s25, 0
      %p185 = por %p183, %p184
      %p186 = scmp.ne.s32.totalorder %s178, %s180
      %p187 = scmp.eq.s32.totalorder %s30, 1
      %p188 = por %p186, %p187
      %p189 = scmp.ne.s32.totalorder %s180, %s181
      %p190 = scmp.eq.s32.totalorder %s30, 0
      %p191 = por %p189, %p190
      %p192 = scmp.ne.s32.totalorder %s180, %s181
      %p193 = scmp.eq.s32.totalorder %s31, 1
      %p194 = por %p192, %p193
      %p196 = scmp.ne.s32.totalorder %s181, %s195
      %p197 = scmp.eq.s32.totalorder %s31, 0
      %p198 = por %p196, %p197
      %s200 = sadd.s32 %s199, 1
      %p203 = scmp.eq.s32.totalorder %s25, 1
      %p204 = scmp.ne.s32.totalorder %s199, %s201
      %p205 = scmp.eq.s32.totalorder %s25, 0
      %p206 = por %p204, %p205
      %p207 = scmp.ne.s32.totalorder %s199, %s201
      %p208 = scmp.eq.s32.totalorder %s30, 1
      %p209 = por %p207, %p208
      %p210 = scmp.ne.s32.totalorder %s201, %s202
      %p211 = scmp.eq.s32.totalorder %s30, 0
      %p212 = por %p210, %p211
      %p213 = scmp.ne.s32.totalorder %s201, %s202
      %p214 = scmp.eq.s32.totalorder %s31, 1
      %p215 = por %p213, %p214
      %p217 = scmp.ne.s32.totalorder %s202, %s216
      %p218 = scmp.eq.s32.totalorder %s31, 0
      %p219 = por %p217, %p218
      %s221 = sadd.s32 %s220, 1
      %p224 = scmp.eq.s32.totalorder %s25, 1
      %p225 = scmp.ne.s32.totalorder %s220, %s222
      %p226 = scmp.eq.s32.totalorder %s25, 0
      %p227 = por %p225, %p226
      %p228 = scmp.ne.s32.totalorder %s220, %s222
      %p229 = scmp.eq.s32.totalorder %s30, 1
      %p230 = por %p228, %p229
      %p231 = scmp.ne.s32.totalorder %s222, %s223
      %p232 = scmp.eq.s32.totalorder %s30, 0
      %p233 = por %p231, %p232
      %p234 = scmp.ne.s32.totalorder %s222, %s223
      %p235 = scmp.eq.s32.totalorder %s31, 1
      %p236 = por %p234, %p235
      %p238 = scmp.ne.s32.totalorder %s223, %s237
      %p239 = scmp.eq.s32.totalorder %s31, 0
      %p240 = por %p238, %p239
      %s242 = sadd.s32 %s241, 1
      %p245 = scmp.eq.s32.totalorder %s25, 1
      %p246 = scmp.ne.s32.totalorder %s241, %s243
      %p247 = scmp.eq.s32.totalorder %s25, 0
      %p248 = por %p246, %p247
      %p249 = scmp.ne.s32.totalorder %s241, %s243
      %p250 = scmp.eq.s32.totalorder %s30, 1
      %p251 = por %p249, %p250
      %p252 = scmp.ne.s32.totalorder %s243, %s244
      %p253 = scmp.eq.s32.totalorder %s30, 0
      %p254 = por %p252, %p253
      %p255 = scmp.ne.s32.totalorder %s243, %s244
      %p256 = scmp.eq.s32.totalorder %s31, 1
      %p257 = por %p255, %p256
      %p259 = scmp.ne.s32.totalorder %s244, %s258
      %p260 = scmp.eq.s32.totalorder %s31, 0
      %p261 = por %p259, %p260
      %s263 = sadd.s32 %s262, 1
      %p266 = scmp.eq.s32.totalorder %s25, 1
      %p267 = scmp.ne.s32.totalorder %s262, %s264
      %p268 = scmp.eq.s32.totalorder %s25, 0
      %p269 = por %p267, %p268
      %p270 = scmp.ne.s32.totalorder %s262, %s264
      %p271 = scmp.eq.s32.totalorder %s30, 1
      %p272 = por %p270, %p271
      %p273 = scmp.ne.s32.totalorder %s264, %s265
      %p274 = scmp.eq.s32.totalorder %s30, 0
      %p275 = por %p273, %p274
      %p276 = scmp.ne.s32.totalorder %s264, %s265
      %p277 = scmp.eq.s32.totalorder %s31, 1
      %p278 = por %p276, %p277
      %p280 = scmp.ne.s32.totalorder %s265, %s279
      %p281 = scmp.eq.s32.totalorder %s31, 0
      %p282 = por %p280, %p281
      %s284 = sadd.s32 %s283, 1
      %p287 = scmp.eq.s32.totalorder %s25, 1
      %p288 = scmp.ne.s32.totalorder %s283, %s285
      %p289 = scmp.eq.s32.totalorder %s25, 0
      %p290 = por %p288, %p289
      %p291 = scmp.ne.s32.totalorder %s283, %s285
      %p292 = scmp.eq.s32.totalorder %s30, 1
      %p293 = por %p291, %p292
      %p294 = scmp.ne.s32.totalorder %s285, %s286
      %p295 = scmp.eq.s32.totalorder %s30, 0
      %p296 = por %p294, %p295
      %p297 = scmp.ne.s32.totalorder %s285, %s286
      %p298 = scmp.eq.s32.totalorder %s31, 1
      %p299 = por %p297, %p298
      %p301 = scmp.ne.s32.totalorder %s286, %s300
      %p302 = scmp.eq.s32.totalorder %s31, 0
      %p303 = por %p301, %p302
      %s304 = ssub.s32 %s32, %s51
      %s305 = ssub.s32 %s33, %s47
      %s306 = sor.u32 %s304, %s305
      %p307 = scmp.eq.s32.totalorder %s306, 0
      %s309 = sadd.s32 %s308, 1
      %s310 = scalar_select %p307, %s308, %s309
      %p313 = pneg %p307
      %p314 = scmp.eq.s32.totalorder %s25, 1
      %p315 = por %p313, %p314
      %p316 = scmp.ne.s32.totalorder %s308, %s311
      %p317 = scmp.eq.s32.totalorder %s25, 0
      %p318 = por %p316, %p317
      %p319 = scmp.ne.s32.totalorder %s308, %s311
      %p320 = scmp.eq.s32.totalorder %s30, 1
      %p321 = por %p319, %p320
      %p322 = scmp.ne.s32.totalorder %s311, %s312
      %p323 = scmp.eq.s32.totalorder %s30, 0
      %p324 = por %p322, %p323
      %p325 = scmp.ne.s32.totalorder %s311, %s312
      %p326 = scmp.eq.s32.totalorder %s31, 1
      %p327 = por %p325, %p326
      %p329 = scmp.ne.s32.totalorder %s312, %s328
      %p330 = scmp.eq.s32.totalorder %s31, 0
      %p331 = por %p329, %p330
      %p332 = scmp.le.s32.totalorder 1, %s25
      %p333 = scmp.lt.s32.totalorder %s25, 3
      %p334 = pnand %p332, %p333
      %p335 = pneg %p334
      // Predicated region
      $region9: #{tpu_custom_call.1} parent=5 // pred_check
        _
      $region10: #{tpu_custom_call.1} parent=5 // pred_check_branch
        %337 = sbr.rel (%p334) target = $region12
      $region11: #{tpu_custom_call.1} parent=5 // pred_region
        %s338 = ssub.s32 %s25, 1
        // Predicated region
        $region13: #{tpu_custom_call.1} parent=11 // pred_check
          %p339 = pneg %p149
        $region14: #{tpu_custom_call.1} parent=11 // pred_check_branch
          %341 = sbr.rel (%p339) target = $region16
        $region15: #{tpu_custom_call.1} parent=11 // pred_region
          %343 = vsyncadd [#allocation10], 0
          %s344 = sshll.u32 %s3, 4
          %s345 = int_to_ptr.hbm [resolvable:$true] %s344
          %s346 = sshll.u32 [#allocation9], 4
          %s347 = int_to_ptr.vmem [resolvable:$true] %s346
          %352 = dma.hbm_to_vmem [thread:$0]  %s345, 512, %s347, [#allocation10], 128, 128, 8
        $region16: #{tpu_custom_call.1} parent=11 // pred_fallthru
          _
        // Predicated region
        $region17: #{tpu_custom_call.1} parent=11 // pred_check
          %p353 = pneg %p170
        $region18: #{tpu_custom_call.1} parent=11 // pred_check_branch
          %355 = sbr.rel (%p353) target = $region20
        $region19: #{tpu_custom_call.1} parent=11 // pred_region
          _
        $region20: #{tpu_custom_call.1} parent=11 // pred_fallthru
          _
        // Predicated region
        $region21: #{tpu_custom_call.1} parent=11 // pred_check
          %p356 = pneg %p191
        $region22: #{tpu_custom_call.1} parent=11 // pred_check_branch
          %358 = sbr.rel (%p356) target = $region24
        $region23: #{tpu_custom_call.1} parent=11 // pred_region
          %360 = vsyncadd [#allocation10], 0
          %s361 = sshll.u32 %s5, 4
          %s362 = int_to_ptr.hbm [resolvable:$true] %s361
          %s363 = sshll.u32 [#allocation11], 4
          %s364 = int_to_ptr.vmem [resolvable:$true] %s363
          %369 = dma.hbm_to_vmem [thread:$0]  %s362, 512, %s364, [#allocation10], 128, 128, 8
        $region24: #{tpu_custom_call.1} parent=11 // pred_fallthru
          _
        // Predicated region
        $region25: #{tpu_custom_call.1} parent=11 // pred_check
          %p370 = pneg %p212
        $region26: #{tpu_custom_call.1} parent=11 // pred_check_branch
          %372 = sbr.rel (%p370) target = $region28
        $region27: #{tpu_custom_call.1} parent=11 // pred_region
          _
        $region28: #{tpu_custom_call.1} parent=11 // pred_fallthru
          _
        // Predicated region
        $region29: #{tpu_custom_call.1} parent=11 // pred_check
          %p373 = pneg %p233
        $region30: #{tpu_custom_call.1} parent=11 // pred_check_branch
          %375 = sbr.rel (%p373) target = $region32
        $region31: #{tpu_custom_call.1} parent=11 // pred_region
          %377 = vsyncadd [#allocation13], 0
          %s378 = sshll.u32 %s7, 4
          %s379 = int_to_ptr.hbm [resolvable:$true] %s378
          %s380 = sshll.u32 [#allocation12], 4
          %s381 = int_to_ptr.vmem [resolvable:$true] %s380
          %386 = dma.hbm_to_vmem [thread:$0]  %s379, 512, %s381, [#allocation13], 128, 128, 8
        $region32: #{tpu_custom_call.1} parent=11 // pred_fallthru
          _
        // Predicated region
        $region33: #{tpu_custom_call.1} parent=11 // pred_check
          %p387 = pneg %p254
        $region34: #{tpu_custom_call.1} parent=11 // pred_check_branch
          %389 = sbr.rel (%p387) target = $region36
        $region35: #{tpu_custom_call.1} parent=11 // pred_region
          _
        $region36: #{tpu_custom_call.1} parent=11 // pred_fallthru
          _
        // Predicated region
        $region37: #{tpu_custom_call.1} parent=11 // pred_check
          %p390 = pneg %p275
        $region38: #{tpu_custom_call.1} parent=11 // pred_check_branch
          %392 = sbr.rel (%p390) target = $region40
        $region39: #{tpu_custom_call.1} parent=11 // pred_region
          %394 = vsyncadd [#allocation13], 0
          %s395 = sshll.u32 %s9, 4
          %s396 = int_to_ptr.hbm [resolvable:$true] %s395
          %s397 = sshll.u32 [#allocation14], 4
          %s398 = int_to_ptr.vmem [resolvable:$true] %s397
          %403 = dma.hbm_to_vmem [thread:$0]  %s396, 512, %s398, [#allocation13], 128, 128, 8
        $region40: #{tpu_custom_call.1} parent=11 // pred_fallthru
          _
        // Predicated region
        $region41: #{tpu_custom_call.1} parent=11 // pred_check
          %p404 = pneg %p296
        $region42: #{tpu_custom_call.1} parent=11 // pred_check_branch
          %406 = sbr.rel (%p404) target = $region44
        $region43: #{tpu_custom_call.1} parent=11 // pred_region
          _
        $region44: #{tpu_custom_call.1} parent=11 // pred_fallthru
          _
      $region12: #{tpu_custom_call.1} parent=5 // pred_fallthru
        _
      %p407 = scmp.lt.s32.totalorder %s25, 2
      // Predicated region
      $region45: #{tpu_custom_call.1} parent=5 // pred_check
        %p408 = pneg %p407
      $region46: #{tpu_custom_call.1} parent=5 // pred_check_branch
        %410 = sbr.rel (%p408) target = $region48
      $region47: #{tpu_custom_call.1} parent=5 // pred_region
        // Predicated region
        $region49: #{tpu_custom_call.1} parent=47 // pred_check
          %p411 = pneg %p66
        $region50: #{tpu_custom_call.1} parent=47 // pred_check_branch
          %413 = sbr.rel (%p411) target = $region52
        $region51: #{tpu_custom_call.1} parent=47 // pred_region
          %p414 = scmp.lt.s32.totalorder %s32, 1
          %s415 = scalar_select %p414, %s32, 1
          %p416 = scmp.lt.s32.totalorder %s33, 0
          %s417 = scalar_select %p416, %s33, 0
          %s418 = smul.addr %s415, 4
          %s419 = sadd.s32 %s417, %s418
          %s420 = smul.addr %s419, 8
          %s421 = scalar_lea.vmem %s0, %s420
        $region52: #{tpu_custom_call.1} parent=47 // pred_fallthru
          _
        // Predicated region
        $region53: #{tpu_custom_call.1} parent=47 // pred_check
          %p422 = pneg %p94
        $region54: #{tpu_custom_call.1} parent=47 // pred_check_branch
          %424 = sbr.rel (%p422) target = $region56
        $region55: #{tpu_custom_call.1} parent=47 // pred_region
          %p425 = scmp.lt.s32.totalorder %s32, 1
          %s426 = scalar_select %p425, %s32, 1
          %p427 = scmp.lt.s32.totalorder %s34, 0
          %s428 = scalar_select %p427, %s34, 0
          %s429 = smul.addr %s426, 4
          %s430 = sadd.s32 %s428, %s429
          %s431 = smul.addr %s430, 8
          %s432 = scalar_lea.vmem %s1, %s431
        $region56: #{tpu_custom_call.1} parent=47 // pred_fallthru
          _
        // Predicated region
        $region57: #{tpu_custom_call.1} parent=47 // pred_check
          %p433 = pneg %p122
        $region58: #{tpu_custom_call.1} parent=47 // pred_check_branch
          %435 = sbr.rel (%p433) target = $region60
        $region59: #{tpu_custom_call.1} parent=47 // pred_region
          %s436 = sand.u32 %s112, 1
          %s437 = scalar_lea.sflag [#allocation7], %s436
          %s438 = sand.u32 %s112, 1
          %s439 = smul.addr %s438, 32
          %s440 = scalar_lea.vmem [#allocation6], %s439
          %442 = vsyncadd %s437, 0
          %s443 = smul.addr %s32, 4
          %s444 = sadd.s32 %s34, %s443
          %s445 = smul.addr %s444, 8
          %s446 = scalar_lea.hbm %s2, %s445
          %s447 = sshll.u32 %s446, 4
          %s448 = int_to_ptr.hbm [resolvable:$true] %s447
          %s449 = sshll.u32 %s440, 4
          %s450 = int_to_ptr.vmem [resolvable:$true] %s449
          %455 = dma.hbm_to_vmem [thread:$0]  %s448, 512, %s450, %s437, 128, 128, 8
        $region60: #{tpu_custom_call.1} parent=47 // pred_fallthru
          _
      $region48: #{tpu_custom_call.1} parent=5 // pred_fallthru
        _
      %p456 = scmp.le.s32.totalorder 1, %s25
      %p457 = scmp.lt.s32.totalorder %s25, 3
      %p458 = pnand %p456, %p457
      %p459 = pneg %p458
      // Predicated region
      $region61: #{tpu_custom_call.1} parent=5 // pred_check
        _
      $region62: #{tpu_custom_call.1} parent=5 // pred_check_branch
        %461 = sbr.rel (%p458) target = $region64
      $region63: #{tpu_custom_call.1} parent=5 // pred_region
        %s462 = ssub.s32 %s25, 1
        %s463 = sand.u32 %s115, 1
        %s464 = scalar_lea.sflag [#allocation7], %s463
        %s465 = sand.u32 %s115, 1
        %s466 = smul.addr %s465, 32
        %s467 = scalar_lea.vmem [#allocation6], %s466
        // Predicated region
        $region65: #{tpu_custom_call.1} parent=63 // pred_check
          %p468 = pneg %p128
        $region66: #{tpu_custom_call.1} parent=63 // pred_check_branch
          %470 = sbr.rel (%p468) target = $region68
        $region67: #{tpu_custom_call.1} parent=63 // pred_region
          %472 = dma.done %s464, 512
        $region68: #{tpu_custom_call.1} parent=63 // pred_fallthru
          _
        // Predicated region
        $region69: #{tpu_custom_call.1} parent=63 // pred_check
          %p473 = pneg %p149
        $region70: #{tpu_custom_call.1} parent=63 // pred_check_branch
          %475 = sbr.rel (%p473) target = $region72
        $region71: #{tpu_custom_call.1} parent=63 // pred_region
          %477 = dma.done [#allocation10], 512
        $region72: #{tpu_custom_call.1} parent=63 // pred_fallthru
          _
        // Predicated region
        $region73: #{tpu_custom_call.1} parent=63 // pred_check
          %p478 = pneg %p191
        $region74: #{tpu_custom_call.1} parent=63 // pred_check_branch
          %480 = sbr.rel (%p478) target = $region76
        $region75: #{tpu_custom_call.1} parent=63 // pred_region
          %482 = dma.done [#allocation10], 512
        $region76: #{tpu_custom_call.1} parent=63 // pred_fallthru
          _
        // Predicated region
        $region77: #{tpu_custom_call.1} parent=63 // pred_check
          %p483 = pneg %p233
        $region78: #{tpu_custom_call.1} parent=63 // pred_check_branch
          %485 = sbr.rel (%p483) target = $region80
        $region79: #{tpu_custom_call.1} parent=63 // pred_region
          %487 = dma.done [#allocation13], 512
        $region80: #{tpu_custom_call.1} parent=63 // pred_fallthru
          _
        // Predicated region
        $region81: #{tpu_custom_call.1} parent=63 // pred_check
          %p488 = pneg %p275
        $region82: #{tpu_custom_call.1} parent=63 // pred_check_branch
          %490 = sbr.rel (%p488) target = $region84
        $region83: #{tpu_custom_call.1} parent=63 // pred_region
          %492 = dma.done [#allocation13], 512
        $region84: #{tpu_custom_call.1} parent=63 // pred_fallthru
          _
        %p493 = scmp.lt.s32.totalorder %s35, 1
        %s494 = scalar_select %p493, %s35, 1
        %p495 = scmp.lt.s32.totalorder %s36, 0
        %s496 = scalar_select %p495, %s36, 0
        %s497 = smul.addr %s494, 4
        %s498 = sadd.s32 %s496, %s497
        %s499 = smul.addr %s498, 8
        %s500 = scalar_lea.vmem %s0, %s499
        %p501 = pneg %p72
        %p502 = pneg %p69
        %p503 = scmp.lt.s32.totalorder %s35, 1
        %s504 = scalar_select %p503, %s35, 1
        %p505 = scmp.lt.s32.totalorder %s37, 0
        %s506 = scalar_select %p505, %s37, 0
        %s507 = smul.addr %s504, 4
        %s508 = sadd.s32 %s506, %s507
        %s509 = smul.addr %s508, 8
        %s510 = scalar_lea.vmem %s1, %s509
        %p511 = pneg %p100
        %p512 = pneg %p97
        %s513 = sand.u32 %s115, 1
        %s514 = scalar_lea.sflag [#allocation7], %s513
        %s515 = sand.u32 %s115, 1
        %s516 = smul.addr %s515, 32
        %s517 = scalar_lea.vmem [#allocation6], %s516
        %p518 = pneg %p128
        %p519 = pneg %p125
        %p520 = pneg %p149
        %p521 = pneg %p146
        %p522 = pneg %p170
        %p523 = pneg %p167
        %p524 = pneg %p191
        %p525 = pneg %p188
        %p526 = pneg %p212
        %p527 = pneg %p209
        %p528 = pneg %p233
        %p529 = pneg %p230
        %p530 = pneg %p254
        %p531 = pneg %p251
        %p532 = pneg %p275
        %p533 = pneg %p272
        %p534 = pneg %p296
        %p535 = pneg %p293
        %p536 = pneg %p324
        %p537 = pneg %p321
        %s538 = sand.u32 %s311, 1
        %s539 = scalar_lea.sflag [#allocation8], %s538
        %s540 = sand.u32 %s311, 1
        %s541 = smul.addr %s540, 32
        %s542 = scalar_lea.vmem [#allocation15], %s541
        %p543 = scmp.lt.s32.totalorder %s35, 1
        %s544 = scalar_select %p543, %s35, 1
        %p545 = scmp.lt.s32.totalorder %s36, 0
        %s546 = scalar_select %p545, %s36, 0
        %s547 = smul.addr %s544, 4
        %s548 = sadd.s32 %s546, %s547
        %s549 = smul.addr %s548, 8
        %s550 = scalar_lea.vmem %s0, %s549
        %p551 = scmp.lt.s32.totalorder %s35, 1
        %s552 = scalar_select %p551, %s35, 1
        %p553 = scmp.lt.s32.totalorder %s37, 0
        %s554 = scalar_select %p553, %s37, 0
        %s555 = smul.addr %s552, 4
        %s556 = sadd.s32 %s554, %s555
        %s557 = smul.addr %s556, 8
        %s558 = scalar_lea.vmem %s1, %s557
        %p559 = scmp.eq.s32.totalorder %s37, 0
        // Predicated region
        $region85: #{tpu_custom_call.1} parent=63 // pred_check
          %p560 = pneg %p559
        $region86: #{tpu_custom_call.1} parent=63 // pred_check_branch
          %562 = sbr.rel (%p560) target = $region88
        $region87: #{tpu_custom_call.1} parent=63 // pred_region
          %v563 = vld [vmem:[%s550] sm:$0xff]
          %v564 = vld [vmem:[%s550 + $0x8] sm:$0xff]
          %v565 = vld [vmem:[%s550 + $0x10] sm:$0xff]
          %v566 = vld [vmem:[%s550 + $0x18] sm:$0xff]
          %v567 = vld [vmem:[#allocation9] sm:$0xff]
          %v568 = vld [vmem:[#allocation9 + $0x8] sm:$0xff]
          %v569 = vld [vmem:[#allocation9 + $0x10] sm:$0xff]
          %v570 = vld [vmem:[#allocation9 + $0x18] sm:$0xff]
          %v571 = vld [vmem:[%s4] sm:$0xff]
          %v572 = vld [vmem:[%s4 + $0x8] sm:$0xff]
          %v573 = vld [vmem:[%s4 + $0x10] sm:$0xff]
          %v574 = vld [vmem:[%s4 + $0x18] sm:$0xff]
          %576 = vset.pattern.permute.xlu0 0
          %577 = vperm.xlu0 %576, %v571
          %v578 = vpop.permute.xlu0 %577
          %581 = vset.pattern.permute.xlu0 0
          %582 = vperm.xlu0 %581, %v572
          %v583 = vpop.permute.xlu0 %582
          %586 = vset.pattern.permute.xlu0 0
          %587 = vperm.xlu0 %586, %v573
          %v588 = vpop.permute.xlu0 %587
          %591 = vset.pattern.permute.xlu0 0
          %592 = vperm.xlu0 %591, %v574
          %v593 = vpop.permute.xlu0 %592
          %vm595 = vcmask 261120
          %v597 = vsel %vm595, %v567, 0
          %v600 = vsel %vm595, %v568, 0
          %v603 = vsel %vm595, %v569, 0
          %v606 = vsel %vm595, %v570, 0
          %608 = vmatpush.msra.mxu0 0.0
          %609 = vmatpush.msra.mxu0 0.0
          %610 = vmatpush.msra.mxu0 0.0
          %611 = vmatpush.msra.mxu0 0.0
          %612 = vmatpush.msra.mxu0 0.0
          %613 = vmatpush.msra.mxu0 0.0
          %614 = vmatpush.msra.mxu0 0.0
          %615 = vmatpush.msra.mxu0 0.0
          %616 = vmatpush.msra.mxu0 0.0
          %617 = vmatpush.msra.mxu0 0.0
          %618 = vmatpush.msra.mxu0 0.0
          %619 = vmatpush.msra.mxu0 0.0
          %620 = vmatpush.msra.mxu0 %v566
          %621 = vmatpush.msra.mxu0 %v565
          %622 = vmatpush.msra.mxu0 %v564
          %623 = vmatpush.msra.mxu0 %v563
          %624 = vmatmul.f32.gmra.mxu0 %v597
          %v625 = vpop.f32.mrf.mxu0
          %v626 = vadd.f32 %v578, %v625
          %627 = vmatmul.f32.gmra.mxu0 %v600
          %v628 = vpop.f32.mrf.mxu0
          %v629 = vadd.f32 %v583, %v628
          %630 = vmatmul.f32.gmra.mxu0 %v603
          %v631 = vpop.f32.mrf.mxu0
          %v632 = vadd.f32 %v588, %v631
          %633 = vmatmul.f32.gmra.mxu0 %v606
          %v634 = vpop.f32.mrf.mxu0
          %v635 = vadd.f32 %v593, %v634
          %636 = vdwg.mxu0
          %637 = vst [vmem:[#allocation2] sm:$0xff] %v626
          %638 = vst [vmem:[#allocation2 + $0x8] sm:$0xff] %v629
          %639 = vst [vmem:[#allocation2 + $0x10] sm:$0xff] %v632
          %640 = vst [vmem:[#allocation2 + $0x18] sm:$0xff] %v635
          %641 = vst [vmem:[#allocation4] sm:$0x1] -inf
          %642 = vst [vmem:[#allocation4 + $0x1] sm:$0x1] -inf
          %643 = vst [vmem:[#allocation4 + $0x2] sm:$0x1] -inf
          %644 = vst [vmem:[#allocation4 + $0x3] sm:$0x1] -inf
          %645 = vst [vmem:[#allocation5] sm:$0x1] 0.0
          %646 = vst [vmem:[#allocation5 + $0x1] sm:$0x1] 0.0
          %647 = vst [vmem:[#allocation5 + $0x2] sm:$0x1] 0.0
          %648 = vst [vmem:[#allocation5 + $0x3] sm:$0x1] 0.0
          %649 = vst [vmem:[#allocation3] sm:$0xff] 0.0
          %650 = vst [vmem:[#allocation3 + $0x8] sm:$0xff] 0.0
          %651 = vst [vmem:[#allocation3 + $0x10] sm:$0xff] 0.0
          %652 = vst [vmem:[#allocation3 + $0x18] sm:$0xff] 0.0
        $region88: #{tpu_custom_call.1} parent=63 // pred_fallthru
          _
        %v653 = vld [vmem:[%s558] sm:$0xff]
        %v654 = vld [vmem:[%s558 + $0x8] sm:$0xff]
        %v655 = vld [vmem:[%s558 + $0x10] sm:$0xff]
        %v656 = vld [vmem:[%s558 + $0x18] sm:$0xff]
        %v657 = vld [vmem:[%s467] sm:$0xff]
        %v658 = vld [vmem:[%s467 + $0x8] sm:$0xff]
        %v659 = vld [vmem:[%s467 + $0x10] sm:$0xff]
        %v660 = vld [vmem:[%s467 + $0x18] sm:$0xff]
        %v661 = vld [vmem:[#allocation11] sm:$0xff]
        %v662 = vld [vmem:[#allocation11 + $0x8] sm:$0xff]
        %v663 = vld [vmem:[#allocation11 + $0x10] sm:$0xff]
        %v664 = vld [vmem:[#allocation11 + $0x18] sm:$0xff]
        %v665 = vld [vmem:[%s6] sm:$0xff]
        %v666 = vld [vmem:[%s6 + $0x8] sm:$0xff]
        %v667 = vld [vmem:[%s6 + $0x10] sm:$0xff]
        %v668 = vld [vmem:[%s6 + $0x18] sm:$0xff]
        %670 = vset.pattern.permute.xlu0 0
        %671 = vperm.xlu0 %670, %v665
        %v672 = vpop.permute.xlu0 %671
        %675 = vset.pattern.permute.xlu0 0
        %676 = vperm.xlu0 %675, %v666
        %v677 = vpop.permute.xlu0 %676
        %680 = vset.pattern.permute.xlu0 0
        %681 = vperm.xlu0 %680, %v667
        %v682 = vpop.permute.xlu0 %681
        %685 = vset.pattern.permute.xlu0 0
        %686 = vperm.xlu0 %685, %v668
        %v687 = vpop.permute.xlu0 %686
        %vm689 = vcmask 261120
        %v691 = vsel %vm689, %v661, 0
        %v694 = vsel %vm689, %v662, 0
        %v697 = vsel %vm689, %v663, 0
        %v700 = vsel %vm689, %v664, 0
        %702 = vmatpush.msra.mxu0 0.0
        %703 = vmatpush.msra.mxu0 0.0
        %704 = vmatpush.msra.mxu0 0.0
        %705 = vmatpush.msra.mxu0 0.0
        %706 = vmatpush.msra.mxu0 0.0
        %707 = vmatpush.msra.mxu0 0.0
        %708 = vmatpush.msra.mxu0 0.0
        %709 = vmatpush.msra.mxu0 0.0
        %710 = vmatpush.msra.mxu0 0.0
        %711 = vmatpush.msra.mxu0 0.0
        %712 = vmatpush.msra.mxu0 0.0
        %713 = vmatpush.msra.mxu0 0.0
        %714 = vmatpush.msra.mxu0 %v656
        %715 = vmatpush.msra.mxu0 %v655
        %716 = vmatpush.msra.mxu0 %v654
        %717 = vmatpush.msra.mxu0 %v653
        %718 = vmatmul.f32.gmra.mxu0 %v691
        %v719 = vpop.f32.mrf.mxu0
        %v720 = vadd.f32 %v672, %v719
        %721 = vmatmul.f32.gmra.mxu0 %v694
        %v722 = vpop.f32.mrf.mxu0
        %v723 = vadd.f32 %v677, %v722
        %724 = vmatmul.f32.gmra.mxu0 %v697
        %v725 = vpop.f32.mrf.mxu0
        %v726 = vadd.f32 %v682, %v725
        %727 = vmatmul.f32.gmra.mxu0 %v700
        %v728 = vpop.f32.mrf.mxu0
        %v729 = vadd.f32 %v687, %v728
        %730 = vdwg.mxu0
        %v731 = vld [vmem:[#allocation12] sm:$0xff]
        %v732 = vld [vmem:[#allocation12 + $0x8] sm:$0xff]
        %v733 = vld [vmem:[#allocation12 + $0x10] sm:$0xff]
        %v734 = vld [vmem:[#allocation12 + $0x18] sm:$0xff]
        %v735 = vld [vmem:[%s8] sm:$0xff]
        %v736 = vld [vmem:[%s8 + $0x8] sm:$0xff]
        %v737 = vld [vmem:[%s8 + $0x10] sm:$0xff]
        %v738 = vld [vmem:[%s8 + $0x18] sm:$0xff]
        %740 = vset.pattern.permute.xlu0 0
        %741 = vperm.xlu0 %740, %v735
        %v742 = vpop.permute.xlu0 %741
        %745 = vset.pattern.permute.xlu0 0
        %746 = vperm.xlu0 %745, %v736
        %v747 = vpop.permute.xlu0 %746
        %750 = vset.pattern.permute.xlu0 0
        %751 = vperm.xlu0 %750, %v737
        %v752 = vpop.permute.xlu0 %751
        %755 = vset.pattern.permute.xlu0 0
        %756 = vperm.xlu0 %755, %v738
        %v757 = vpop.permute.xlu0 %756
        %v760 = vsel %vm689, %v731, 0
        %v763 = vsel %vm689, %v732, 0
        %v766 = vsel %vm689, %v733, 0
        %v769 = vsel %vm689, %v734, 0
        %771 = vmatpush.msra.mxu0 0.0
        %772 = vmatpush.msra.mxu0 0.0
        %773 = vmatpush.msra.mxu0 0.0
        %774 = vmatpush.msra.mxu0 0.0
        %775 = vmatpush.msra.mxu0 0.0
        %776 = vmatpush.msra.mxu0 0.0
        %777 = vmatpush.msra.mxu0 0.0
        %778 = vmatpush.msra.mxu0 0.0
        %779 = vmatpush.msra.mxu0 0.0
        %780 = vmatpush.msra.mxu0 0.0
        %781 = vmatpush.msra.mxu0 0.0
        %782 = vmatpush.msra.mxu0 0.0
        %783 = vmatpush.msra.mxu0 %v660
        %784 = vmatpush.msra.mxu0 %v659
        %785 = vmatpush.msra.mxu0 %v658
        %786 = vmatpush.msra.mxu0 %v657
        %787 = vmatmul.f32.gmra.mxu0 %v760
        %v788 = vpop.f32.mrf.mxu0
        %v789 = vadd.f32 %v742, %v788
        %790 = vmatmul.f32.gmra.mxu0 %v763
        %v791 = vpop.f32.mrf.mxu0
        %v792 = vadd.f32 %v747, %v791
        %793 = vmatmul.f32.gmra.mxu0 %v766
        %v794 = vpop.f32.mrf.mxu0
        %v795 = vadd.f32 %v752, %v794
        %796 = vmatmul.f32.gmra.mxu0 %v769
        %v797 = vpop.f32.mrf.mxu0
        %v798 = vadd.f32 %v757, %v797
        %799 = vdwg.mxu0
        %v800 = vlaneseq
        %v801 = vshrl.u32 %v800, 7
        %v802 = vadd.s32 %v801, 8
        %v803 = vadd.s32 %v801, 16
        %v804 = vadd.s32 %v801, 24
        %v805 = vadd.s32 %v801, 32
        %v806 = vadd.s32 %v801, 40
        %v807 = vadd.s32 %v801, 48
        %v808 = vadd.s32 %v801, 56
        %v809 = vadd.s32 %v801, 64
        %v810 = vadd.s32 %v801, 72
        %v811 = vadd.s32 %v801, 80
        %v812 = vadd.s32 %v801, 88
        %v813 = vadd.s32 %v801, 96
        %v814 = vadd.s32 %v801, 104
        %v815 = vadd.s32 %v801, 112
        %v816 = vadd.s32 %v801, 120
        %s817 = smul.u32 %s37, 128
        %v818 = vstv %s817
        %v819 = vadd.s32 %v801, %v818
        %v820 = vadd.s32 %v802, %v818
        %v821 = vadd.s32 %v803, %v818
        %v822 = vadd.s32 %v804, %v818
        %v823 = vadd.s32 %v805, %v818
        %v824 = vadd.s32 %v806, %v818
        %v825 = vadd.s32 %v807, %v818
        %v826 = vadd.s32 %v808, %v818
        %v827 = vadd.s32 %v809, %v818
        %v828 = vadd.s32 %v810, %v818
        %v829 = vadd.s32 %v811, %v818
        %v830 = vadd.s32 %v812, %v818
        %v831 = vadd.s32 %v813, %v818
        %v832 = vadd.s32 %v814, %v818
        %v833 = vadd.s32 %v815, %v818
        %v834 = vadd.s32 %v816, %v818
        %vm835 = vcmp.lt.s32.totalorder %v819, 16
        %vm836 = vcmp.lt.s32.totalorder %v820, 16
        %vm837 = vcmp.lt.s32.totalorder %v821, 16
        %vm838 = vcmp.lt.s32.totalorder %v822, 16
        %vm839 = vcmp.lt.s32.totalorder %v823, 16
        %vm840 = vcmp.lt.s32.totalorder %v824, 16
        %vm841 = vcmp.lt.s32.totalorder %v825, 16
        %vm842 = vcmp.lt.s32.totalorder %v826, 16
        %vm843 = vcmp.lt.s32.totalorder %v827, 16
        %vm844 = vcmp.lt.s32.totalorder %v828, 16
        %vm845 = vcmp.lt.s32.totalorder %v829, 16
        %vm846 = vcmp.lt.s32.totalorder %v830, 16
        %vm847 = vcmp.lt.s32.totalorder %v831, 16
        %vm848 = vcmp.lt.s32.totalorder %v832, 16
        %vm849 = vcmp.lt.s32.totalorder %v833, 16
        %vm850 = vcmp.lt.s32.totalorder %v834, 16
        %v851 = vld [vmem:[#allocation2] sm:$0xff]
        %852 = vxpose.xlu0.b32.start [1/16] %v720, 128
        %853 = vxpose.xlu0.b32.cont [2/16] 0.0, 128
        %854 = vxpose.xlu0.b32.cont [3/16] 0.0, 128
        %855 = vxpose.xlu0.b32.cont [4/16] 0.0, 128
        %856 = vxpose.xlu0.b32.cont [5/16] 0.0, 128
        %857 = vxpose.xlu0.b32.cont [6/16] 0.0, 128
        %858 = vxpose.xlu0.b32.cont [7/16] 0.0, 128
        %859 = vxpose.xlu0.b32.cont [8/16] 0.0, 128
        %860 = vxpose.xlu0.b32.cont [9/16] 0.0, 128
        %861 = vxpose.xlu0.b32.cont [10/16] 0.0, 128
        %862 = vxpose.xlu0.b32.cont [11/16] 0.0, 128
        %863 = vxpose.xlu0.b32.cont [12/16] 0.0, 128
        %864 = vxpose.xlu0.b32.cont [13/16] 0.0, 128
        %865 = vxpose.xlu0.b32.cont [14/16] 0.0, 128
        %866 = vxpose.xlu0.b32.cont [15/16] 0.0, 128
        %867 = vxpose.xlu0.b32.end [16/16] 0.0, 128
        %v868 = vpop.trf.xlu0
        %v869 = vpop.trf.xlu0
        %v870 = vpop.trf.xlu0
        %v871 = vpop.trf.xlu0
        %v872 = vpop.trf.xlu0
        %v873 = vpop.trf.xlu0
        %v874 = vpop.trf.xlu0
        %v875 = vpop.trf.xlu0
        %v876 = vpop.trf.xlu0
        %v877 = vpop.trf.xlu0
        %v878 = vpop.trf.xlu0
        %v879 = vpop.trf.xlu0
        %v880 = vpop.trf.xlu0
        %v881 = vpop.trf.xlu0
        %v882 = vpop.trf.xlu0
        %v883 = vpop.trf.xlu0
        %vm884 = vcmask 64512
        %v886 = vsel %vm884, %v868, 0
        %v889 = vsel %vm884, %v869, 0
        %v892 = vsel %vm884, %v870, 0
        %v895 = vsel %vm884, %v871, 0
        %v898 = vsel %vm884, %v872, 0
        %v901 = vsel %vm884, %v873, 0
        %v904 = vsel %vm884, %v874, 0
        %v907 = vsel %vm884, %v875, 0
        %v910 = vsel %vm884, %v876, 0
        %v913 = vsel %vm884, %v877, 0
        %v916 = vsel %vm884, %v878, 0
        %v919 = vsel %vm884, %v879, 0
        %v922 = vsel %vm884, %v880, 0
        %v925 = vsel %vm884, %v881, 0
        %v928 = vsel %vm884, %v882, 0
        %v931 = vsel %vm884, %v883, 0
        %933 = vmatpush.msra.mxu0 0.0
        %934 = vmatpush.msra.mxu0 0.0
        %935 = vmatpush.msra.mxu0 0.0
        %936 = vmatpush.msra.mxu0 0.0
        %937 = vmatpush.msra.mxu0 0.0
        %938 = vmatpush.msra.mxu0 0.0
        %939 = vmatpush.msra.mxu0 0.0
        %940 = vmatpush.msra.mxu0 0.0
        %941 = vmatpush.msra.mxu0 0.0
        %942 = vmatpush.msra.mxu0 0.0
        %943 = vmatpush.msra.mxu0 0.0
        %944 = vmatpush.msra.mxu0 0.0
        %945 = vmatpush.msra.mxu0 0.0
        %946 = vmatpush.msra.mxu0 0.0
        %947 = vmatpush.msra.mxu0 0.0
        %948 = vmatpush.msra.mxu0 %v851
        %949 = vmatmul.f32.gmra.mxu0 %v886
        %v950 = vpop.f32.mrf.mxu0
        %v951 = vadd.f32 0.0, %v950
        %952 = vmatmul.f32.gmra.mxu0 %v889
        %v953 = vpop.f32.mrf.mxu0
        %v954 = vadd.f32 0.0, %v953
        %955 = vmatmul.f32.gmra.mxu0 %v892
        %v956 = vpop.f32.mrf.mxu0
        %v957 = vadd.f32 0.0, %v956
        %958 = vmatmul.f32.gmra.mxu0 %v895
        %v959 = vpop.f32.mrf.mxu0
        %v960 = vadd.f32 0.0, %v959
        %961 = vmatmul.f32.gmra.mxu0 %v898
        %v962 = vpop.f32.mrf.mxu0
        %v963 = vadd.f32 0.0, %v962
        %964 = vmatmul.f32.gmra.mxu0 %v901
        %v965 = vpop.f32.mrf.mxu0
        %v966 = vadd.f32 0.0, %v965
        %967 = vmatmul.f32.gmra.mxu0 %v904
        %v968 = vpop.f32.mrf.mxu0
        %v969 = vadd.f32 0.0, %v968
        %970 = vmatmul.f32.gmra.mxu0 %v907
        %v971 = vpop.f32.mrf.mxu0
        %v972 = vadd.f32 0.0, %v971
        %973 = vmatmul.f32.gmra.mxu0 %v910
        %v974 = vpop.f32.mrf.mxu0
        %v975 = vadd.f32 0.0, %v974
        %976 = vmatmul.f32.gmra.mxu0 %v913
        %v977 = vpop.f32.mrf.mxu0
        %v978 = vadd.f32 0.0, %v977
        %979 = vmatmul.f32.gmra.mxu0 %v916
        %v980 = vpop.f32.mrf.mxu0
        %v981 = vadd.f32 0.0, %v980
        %982 = vmatmul.f32.gmra.mxu0 %v919
        %v983 = vpop.f32.mrf.mxu0
        %v984 = vadd.f32 0.0, %v983
        %985 = vmatmul.f32.gmra.mxu0 %v922
        %v986 = vpop.f32.mrf.mxu0
        %v987 = vadd.f32 0.0, %v986
        %988 = vmatmul.f32.gmra.mxu0 %v925
        %v989 = vpop.f32.mrf.mxu0
        %v990 = vadd.f32 0.0, %v989
        %991 = vmatmul.f32.gmra.mxu0 %v928
        %v992 = vpop.f32.mrf.mxu0
        %v993 = vadd.f32 0.0, %v992
        %994 = vmatmul.f32.gmra.mxu0 %v931
        %v995 = vpop.f32.mrf.mxu0
        %v996 = vadd.f32 0.0, %v995
        %997 = vdwg.mxu0
        %v998 = vsel %vm835, 1, 0
        %v999 = vsel %vm836, 1, 0
        %v1000 = vsel %vm837, 1, 0
        %v1001 = vsel %vm838, 1, 0
        %v1002 = vsel %vm839, 1, 0
        %v1003 = vsel %vm840, 1, 0
        %v1004 = vsel %vm841, 1, 0
        %v1005 = vsel %vm842, 1, 0
        %v1006 = vsel %vm843, 1, 0
        %v1007 = vsel %vm844, 1, 0
        %v1008 = vsel %vm845, 1, 0
        %v1009 = vsel %vm846, 1, 0
        %v1010 = vsel %vm847, 1, 0
        %v1011 = vsel %vm848, 1, 0
        %v1012 = vsel %vm849, 1, 0
        %v1013 = vsel %vm850, 1, 0
        %vm1014 = vcmp.eq.s32.totalorder %v998, 1
        %vm1015 = vcmp.eq.s32.totalorder %v999, 1
        %vm1016 = vcmp.eq.s32.totalorder %v1000, 1
        %vm1017 = vcmp.eq.s32.totalorder %v1001, 1
        %vm1018 = vcmp.eq.s32.totalorder %v1002, 1
        %vm1019 = vcmp.eq.s32.totalorder %v1003, 1
        %vm1020 = vcmp.eq.s32.totalorder %v1004, 1
        %vm1021 = vcmp.eq.s32.totalorder %v1005, 1
        %vm1022 = vcmp.eq.s32.totalorder %v1006, 1
        %vm1023 = vcmp.eq.s32.totalorder %v1007, 1
        %vm1024 = vcmp.eq.s32.totalorder %v1008, 1
        %vm1025 = vcmp.eq.s32.totalorder %v1009, 1
        %vm1026 = vcmp.eq.s32.totalorder %v1010, 1
        %vm1027 = vcmp.eq.s32.totalorder %v1011, 1
        %vm1028 = vcmp.eq.s32.totalorder %v1012, 1
        %vm1029 = vcmp.eq.s32.totalorder %v1013, 1
        %v1030 = vsel %vm1014, %v951, -inf
        %v1031 = vsel %vm1015, %v954, -inf
        %v1032 = vsel %vm1016, %v957, -inf
        %v1033 = vsel %vm1017, %v960, -inf
        %v1034 = vsel %vm1018, %v963, -inf
        %v1035 = vsel %vm1019, %v966, -inf
        %v1036 = vsel %vm1020, %v969, -inf
        %v1037 = vsel %vm1021, %v972, -inf
        %v1038 = vsel %vm1022, %v975, -inf
        %v1039 = vsel %vm1023, %v978, -inf
        %v1040 = vsel %vm1024, %v981, -inf
        %v1041 = vsel %vm1025, %v984, -inf
        %v1042 = vsel %vm1026, %v987, -inf
        %v1043 = vsel %vm1027, %v990, -inf
        %v1044 = vsel %vm1028, %v993, -inf
        %v1045 = vsel %vm1029, %v996, -inf
        %v1046 = vld [vmem:[#allocation4] sm:$0x1]
        %v1047 = vmax.f32 %v1030, %v1034
        %v1048 = vmax.f32 %v1031, %v1035
        %v1049 = vmax.f32 %v1032, %v1036
        %v1050 = vmax.f32 %v1033, %v1037
        %v1051 = vmax.f32 %v1047, %v1038
        %v1052 = vmax.f32 %v1048, %v1039
        %v1053 = vmax.f32 %v1049, %v1040
        %v1054 = vmax.f32 %v1050, %v1041
        %v1055 = vmax.f32 %v1051, %v1042
        %v1056 = vmax.f32 %v1052, %v1043
        %v1057 = vmax.f32 %v1053, %v1044
        %v1058 = vmax.f32 %v1054, %v1045
        %v1059 = vmax.f32 %v1055, %v1056
        %v1060 = vmax.f32 %v1057, %v1058
        %v1061 = vmax.f32 %v1059, %v1060
        %v1062 = vrot.slane %v1061, 4
        %v1063 = vmax.f32 %v1061, %v1062
        %v1064 = vrot.slane %v1063, 2
        %v1065 = vmax.f32 %v1063, %v1064
        %v1066 = vrot.slane %v1065, 1
        %v1067 = vmax.f32 %v1065, %v1066
        %v1068 = vmax.f32 %v1046, %v1067
        %v1069 = vsub.f32 %v1046, %v1068
        %v1070 = vmul.f32 %v1069, 1.442695
        %v1071 = vpow.pop %v1070
        %v1073 = vperm.slane %v1068, 0
        %v1075 = vsub.f32 %v1030, %v1073
        %v1076 = vsub.f32 %v1031, %v1073
        %v1077 = vsub.f32 %v1032, %v1073
        %v1078 = vsub.f32 %v1033, %v1073
        %v1079 = vsub.f32 %v1034, %v1073
        %v1080 = vsub.f32 %v1035, %v1073
        %v1081 = vsub.f32 %v1036, %v1073
        %v1082 = vsub.f32 %v1037, %v1073
        %v1083 = vsub.f32 %v1038, %v1073
        %v1084 = vsub.f32 %v1039, %v1073
        %v1085 = vsub.f32 %v1040, %v1073
        %v1086 = vsub.f32 %v1041, %v1073
        %v1087 = vsub.f32 %v1042, %v1073
        %v1088 = vsub.f32 %v1043, %v1073
        %v1089 = vsub.f32 %v1044, %v1073
        %v1090 = vsub.f32 %v1045, %v1073
        %v1091 = vmul.f32 %v1075, 1.442695
        %v1092 = vpow.pop %v1091
        %v1093 = vmul.f32 %v1076, 1.442695
        %v1094 = vpow.pop %v1093
        %v1095 = vmul.f32 %v1077, 1.442695
        %v1096 = vpow.pop %v1095
        %v1097 = vmul.f32 %v1078, 1.442695
        %v1098 = vpow.pop %v1097
        %v1099 = vmul.f32 %v1079, 1.442695
        %v1100 = vpow.pop %v1099
        %v1101 = vmul.f32 %v1080, 1.442695
        %v1102 = vpow.pop %v1101
        %v1103 = vmul.f32 %v1081, 1.442695
        %v1104 = vpow.pop %v1103
        %v1105 = vmul.f32 %v1082, 1.442695
        %v1106 = vpow.pop %v1105
        %v1107 = vmul.f32 %v1083, 1.442695
        %v1108 = vpow.pop %v1107
        %v1109 = vmul.f32 %v1084, 1.442695
        %v1110 = vpow.pop %v1109
        %v1111 = vmul.f32 %v1085, 1.442695
        %v1112 = vpow.pop %v1111
        %v1113 = vmul.f32 %v1086, 1.442695
        %v1114 = vpow.pop %v1113
        %v1115 = vmul.f32 %v1087, 1.442695
        %v1116 = vpow.pop %v1115
        %v1117 = vmul.f32 %v1088, 1.442695
        %v1118 = vpow.pop %v1117
        %v1119 = vmul.f32 %v1089, 1.442695
        %v1120 = vpow.pop %v1119
        %v1121 = vmul.f32 %v1090, 1.442695
        %v1122 = vpow.pop %v1121
        %v1123 = vld [vmem:[#allocation5] sm:$0x1]
        %v1124 = vmul.f32 %v1071, %v1123
        %v1125 = vadd.f32 %v1092, %v1094
        %v1126 = vadd.f32 %v1125, %v1096
        %v1127 = vadd.f32 %v1126, %v1098
        %v1128 = vadd.f32 %v1127, %v1100
        %v1129 = vadd.f32 %v1128, %v1102
        %v1130 = vadd.f32 %v1129, %v1104
        %v1131 = vadd.f32 %v1130, %v1106
        %v1132 = vadd.f32 %v1131, %v1108
        %v1133 = vadd.f32 %v1132, %v1110
        %v1134 = vadd.f32 %v1133, %v1112
        %v1135 = vadd.f32 %v1134, %v1114
        %v1136 = vadd.f32 %v1135, %v1116
        %v1137 = vadd.f32 %v1136, %v1118
        %v1138 = vadd.f32 %v1137, %v1120
        %v1139 = vadd.f32 %v1138, %v1122
        %v1140 = vrot.slane %v1139, 4
        %v1141 = vadd.f32 %v1139, %v1140
        %v1142 = vrot.slane %v1141, 2
        %v1143 = vadd.f32 %v1141, %v1142
        %v1144 = vrot.slane %v1143, 1
        %v1145 = vadd.f32 %v1143, %v1144
        %v1146 = vadd.f32 %v1124, %v1145
        %1147 = vst [vmem:[#allocation5] sm:$0x1] %v1146
        %1148 = vst [vmem:[#allocation4] sm:$0x1] %v1068
        %1149 = vmatpush.msra.mxu0 %v1122
        %1150 = vmatpush.msra.mxu0 %v1120
        %1151 = vmatpush.msra.mxu0 %v1118
        %1152 = vmatpush.msra.mxu0 %v1116
        %1153 = vmatpush.msra.mxu0 %v1114
        %1154 = vmatpush.msra.mxu0 %v1112
        %1155 = vmatpush.msra.mxu0 %v1110
        %1156 = vmatpush.msra.mxu0 %v1108
        %1157 = vmatpush.msra.mxu0 %v1106
        %1158 = vmatpush.msra.mxu0 %v1104
        %1159 = vmatpush.msra.mxu0 %v1102
        %1160 = vmatpush.msra.mxu0 %v1100
        %1161 = vmatpush.msra.mxu0 %v1098
        %1162 = vmatpush.msra.mxu0 %v1096
        %1163 = vmatpush.msra.mxu0 %v1094
        %1164 = vmatpush.msra.mxu0 %v1092
        %1165 = vmatmul.f32.gmra.mxu0 %v789
        %v1166 = vpop.f32.mrf.mxu0
        %v1167 = vadd.f32 0.0, %v1166
        %1168 = vdwg.mxu0
        %v1169 = vld [vmem:[#allocation3] sm:$0xff]
        %v1171 = vperm.slane %v1071, 0
        %v1173 = vmul.f32 %v1171, %v1169
        %v1174 = vadd.f32 %v1173, %v1167
        %1175 = vst [vmem:[#allocation3] sm:$0xff] %v1174
        %v1176 = vld [vmem:[#allocation2 + $0x8] sm:$0xff]
        %1177 = vxpose.xlu0.b32.start [1/16] %v723, 128
        %1178 = vxpose.xlu0.b32.cont [2/16] 0.0, 128
        %1179 = vxpose.xlu0.b32.cont [3/16] 0.0, 128
        %1180 = vxpose.xlu0.b32.cont [4/16] 0.0, 128
        %1181 = vxpose.xlu0.b32.cont [5/16] 0.0, 128
        %1182 = vxpose.xlu0.b32.cont [6/16] 0.0, 128
        %1183 = vxpose.xlu0.b32.cont [7/16] 0.0, 128
        %1184 = vxpose.xlu0.b32.cont [8/16] 0.0, 128
        %1185 = vxpose.xlu0.b32.cont [9/16] 0.0, 128
        %1186 = vxpose.xlu0.b32.cont [10/16] 0.0, 128
        %1187 = vxpose.xlu0.b32.cont [11/16] 0.0, 128
        %1188 = vxpose.xlu0.b32.cont [12/16] 0.0, 128
        %1189 = vxpose.xlu0.b32.cont [13/16] 0.0, 128
        %1190 = vxpose.xlu0.b32.cont [14/16] 0.0, 128
        %1191 = vxpose.xlu0.b32.cont [15/16] 0.0, 128
        %1192 = vxpose.xlu0.b32.end [16/16] 0.0, 128
        %v1193 = vpop.trf.xlu0
        %v1194 = vpop.trf.xlu0
        %v1195 = vpop.trf.xlu0
        %v1196 = vpop.trf.xlu0
        %v1197 = vpop.trf.xlu0
        %v1198 = vpop.trf.xlu0
        %v1199 = vpop.trf.xlu0
        %v1200 = vpop.trf.xlu0
        %v1201 = vpop.trf.xlu0
        %v1202 = vpop.trf.xlu0
        %v1203 = vpop.trf.xlu0
        %v1204 = vpop.trf.xlu0
        %v1205 = vpop.trf.xlu0
        %v1206 = vpop.trf.xlu0
        %v1207 = vpop.trf.xlu0
        %v1208 = vpop.trf.xlu0
        %v1210 = vsel %vm884, %v1193, 0
        %v1213 = vsel %vm884, %v1194, 0
        %v1216 = vsel %vm884, %v1195, 0
        %v1219 = vsel %vm884, %v1196, 0
        %v1222 = vsel %vm884, %v1197, 0
        %v1225 = vsel %vm884, %v1198, 0
        %v1228 = vsel %vm884, %v1199, 0
        %v1231 = vsel %vm884, %v1200, 0
        %v1234 = vsel %vm884, %v1201, 0
        %v1237 = vsel %vm884, %v1202, 0
        %v1240 = vsel %vm884, %v1203, 0
        %v1243 = vsel %vm884, %v1204, 0
        %v1246 = vsel %vm884, %v1205, 0
        %v1249 = vsel %vm884, %v1206, 0
        %v1252 = vsel %vm884, %v1207, 0
        %v1255 = vsel %vm884, %v1208, 0
        %1257 = vmatpush.msra.mxu0 0.0
        %1258 = vmatpush.msra.mxu0 0.0
        %1259 = vmatpush.msra.mxu0 0.0
        %1260 = vmatpush.msra.mxu0 0.0
        %1261 = vmatpush.msra.mxu0 0.0
        %1262 = vmatpush.msra.mxu0 0.0
        %1263 = vmatpush.msra.mxu0 0.0
        %1264 = vmatpush.msra.mxu0 0.0
        %1265 = vmatpush.msra.mxu0 0.0
        %1266 = vmatpush.msra.mxu0 0.0
        %1267 = vmatpush.msra.mxu0 0.0
        %1268 = vmatpush.msra.mxu0 0.0
        %1269 = vmatpush.msra.mxu0 0.0
        %1270 = vmatpush.msra.mxu0 0.0
        %1271 = vmatpush.msra.mxu0 0.0
        %1272 = vmatpush.msra.mxu0 %v1176
        %1273 = vmatmul.f32.gmra.mxu0 %v1210
        %v1274 = vpop.f32.mrf.mxu0
        %v1275 = vadd.f32 0.0, %v1274
        %1276 = vmatmul.f32.gmra.mxu0 %v1213
        %v1277 = vpop.f32.mrf.mxu0
        %v1278 = vadd.f32 0.0, %v1277
        %1279 = vmatmul.f32.gmra.mxu0 %v1216
        %v1280 = vpop.f32.mrf.mxu0
        %v1281 = vadd.f32 0.0, %v1280
        %1282 = vmatmul.f32.gmra.mxu0 %v1219
        %v1283 = vpop.f32.mrf.mxu0
        %v1284 = vadd.f32 0.0, %v1283
        %1285 = vmatmul.f32.gmra.mxu0 %v1222
        %v1286 = vpop.f32.mrf.mxu0
        %v1287 = vadd.f32 0.0, %v1286
        %1288 = vmatmul.f32.gmra.mxu0 %v1225
        %v1289 = vpop.f32.mrf.mxu0
        %v1290 = vadd.f32 0.0, %v1289
        %1291 = vmatmul.f32.gmra.mxu0 %v1228
        %v1292 = vpop.f32.mrf.mxu0
        %v1293 = vadd.f32 0.0, %v1292
        %1294 = vmatmul.f32.gmra.mxu0 %v1231
        %v1295 = vpop.f32.mrf.mxu0
        %v1296 = vadd.f32 0.0, %v1295
        %1297 = vmatmul.f32.gmra.mxu0 %v1234
        %v1298 = vpop.f32.mrf.mxu0
        %v1299 = vadd.f32 0.0, %v1298
        %1300 = vmatmul.f32.gmra.mxu0 %v1237
        %v1301 = vpop.f32.mrf.mxu0
        %v1302 = vadd.f32 0.0, %v1301
        %1303 = vmatmul.f32.gmra.mxu0 %v1240
        %v1304 = vpop.f32.mrf.mxu0
        %v1305 = vadd.f32 0.0, %v1304
        %1306 = vmatmul.f32.gmra.mxu0 %v1243
        %v1307 = vpop.f32.mrf.mxu0
        %v1308 = vadd.f32 0.0, %v1307
        %1309 = vmatmul.f32.gmra.mxu0 %v1246
        %v1310 = vpop.f32.mrf.mxu0
        %v1311 = vadd.f32 0.0, %v1310
        %1312 = vmatmul.f32.gmra.mxu0 %v1249
        %v1313 = vpop.f32.mrf.mxu0
        %v1314 = vadd.f32 0.0, %v1313
        %1315 = vmatmul.f32.gmra.mxu0 %v1252
        %v1316 = vpop.f32.mrf.mxu0
        %v1317 = vadd.f32 0.0, %v1316
        %1318 = vmatmul.f32.gmra.mxu0 %v1255
        %v1319 = vpop.f32.mrf.mxu0
        %v1320 = vadd.f32 0.0, %v1319
        %1321 = vdwg.mxu0
        %v1322 = vsel %vm1014, %v1275, -inf
        %v1323 = vsel %vm1015, %v1278, -inf
        %v1324 = vsel %vm1016, %v1281, -inf
        %v1325 = vsel %vm1017, %v1284, -inf
        %v1326 = vsel %vm1018, %v1287, -inf
        %v1327 = vsel %vm1019, %v1290, -inf
        %v1328 = vsel %vm1020, %v1293, -inf
        %v1329 = vsel %vm1021, %v1296, -inf
        %v1330 = vsel %vm1022, %v1299, -inf
        %v1331 = vsel %vm1023, %v1302, -inf
        %v1332 = vsel %vm1024, %v1305, -inf
        %v1333 = vsel %vm1025, %v1308, -inf
        %v1334 = vsel %vm1026, %v1311, -inf
        %v1335 = vsel %vm1027, %v1314, -inf
        %v1336 = vsel %vm1028, %v1317, -inf
        %v1337 = vsel %vm1029, %v1320, -inf
        %s1338 = scalar_lea.vmem [#allocation4], 1
        %v1339 = vld [vmem:[%s1338] sm:$0x1]
        %v1340 = vmax.f32 %v1322, %v1326
        %v1341 = vmax.f32 %v1323, %v1327
        %v1342 = vmax.f32 %v1324, %v1328
        %v1343 = vmax.f32 %v1325, %v1329
        %v1344 = vmax.f32 %v1340, %v1330
        %v1345 = vmax.f32 %v1341, %v1331
        %v1346 = vmax.f32 %v1342, %v1332
        %v1347 = vmax.f32 %v1343, %v1333
        %v1348 = vmax.f32 %v1344, %v1334
        %v1349 = vmax.f32 %v1345, %v1335
        %v1350 = vmax.f32 %v1346, %v1336
        %v1351 = vmax.f32 %v1347, %v1337
        %v1352 = vmax.f32 %v1348, %v1349
        %v1353 = vmax.f32 %v1350, %v1351
        %v1354 = vmax.f32 %v1352, %v1353
        %v1355 = vrot.slane %v1354, 4
        %v1356 = vmax.f32 %v1354, %v1355
        %v1357 = vrot.slane %v1356, 2
        %v1358 = vmax.f32 %v1356, %v1357
        %v1359 = vrot.slane %v1358, 1
        %v1360 = vmax.f32 %v1358, %v1359
        %v1361 = vmax.f32 %v1339, %v1360
        %v1362 = vsub.f32 %v1339, %v1361
        %v1363 = vmul.f32 %v1362, 1.442695
        %v1364 = vpow.pop %v1363
        %v1366 = vperm.slane %v1361, 0
        %v1368 = vsub.f32 %v1322, %v1366
        %v1369 = vsub.f32 %v1323, %v1366
        %v1370 = vsub.f32 %v1324, %v1366
        %v1371 = vsub.f32 %v1325, %v1366
        %v1372 = vsub.f32 %v1326, %v1366
        %v1373 = vsub.f32 %v1327, %v1366
        %v1374 = vsub.f32 %v1328, %v1366
        %v1375 = vsub.f32 %v1329, %v1366
        %v1376 = vsub.f32 %v1330, %v1366
        %v1377 = vsub.f32 %v1331, %v1366
        %v1378 = vsub.f32 %v1332, %v1366
        %v1379 = vsub.f32 %v1333, %v1366
        %v1380 = vsub.f32 %v1334, %v1366
        %v1381 = vsub.f32 %v1335, %v1366
        %v1382 = vsub.f32 %v1336, %v1366
        %v1383 = vsub.f32 %v1337, %v1366
        %v1384 = vmul.f32 %v1368, 1.442695
        %v1385 = vpow.pop %v1384
        %v1386 = vmul.f32 %v1369, 1.442695
        %v1387 = vpow.pop %v1386
        %v1388 = vmul.f32 %v1370, 1.442695
        %v1389 = vpow.pop %v1388
        %v1390 = vmul.f32 %v1371, 1.442695
        %v1391 = vpow.pop %v1390
        %v1392 = vmul.f32 %v1372, 1.442695
        %v1393 = vpow.pop %v1392
        %v1394 = vmul.f32 %v1373, 1.442695
        %v1395 = vpow.pop %v1394
        %v1396 = vmul.f32 %v1374, 1.442695
        %v1397 = vpow.pop %v1396
        %v1398 = vmul.f32 %v1375, 1.442695
        %v1399 = vpow.pop %v1398
        %v1400 = vmul.f32 %v1376, 1.442695
        %v1401 = vpow.pop %v1400
        %v1402 = vmul.f32 %v1377, 1.442695
        %v1403 = vpow.pop %v1402
        %v1404 = vmul.f32 %v1378, 1.442695
        %v1405 = vpow.pop %v1404
        %v1406 = vmul.f32 %v1379, 1.442695
        %v1407 = vpow.pop %v1406
        %v1408 = vmul.f32 %v1380, 1.442695
        %v1409 = vpow.pop %v1408
        %v1410 = vmul.f32 %v1381, 1.442695
        %v1411 = vpow.pop %v1410
        %v1412 = vmul.f32 %v1382, 1.442695
        %v1413 = vpow.pop %v1412
        %v1414 = vmul.f32 %v1383, 1.442695
        %v1415 = vpow.pop %v1414
        %s1416 = scalar_lea.vmem [#allocation5], 1
        %v1417 = vld [vmem:[%s1416] sm:$0x1]
        %v1418 = vmul.f32 %v1364, %v1417
        %v1419 = vadd.f32 %v1385, %v1387
        %v1420 = vadd.f32 %v1419, %v1389
        %v1421 = vadd.f32 %v1420, %v1391
        %v1422 = vadd.f32 %v1421, %v1393
        %v1423 = vadd.f32 %v1422, %v1395
        %v1424 = vadd.f32 %v1423, %v1397
        %v1425 = vadd.f32 %v1424, %v1399
        %v1426 = vadd.f32 %v1425, %v1401
        %v1427 = vadd.f32 %v1426, %v1403
        %v1428 = vadd.f32 %v1427, %v1405
        %v1429 = vadd.f32 %v1428, %v1407
        %v1430 = vadd.f32 %v1429, %v1409
        %v1431 = vadd.f32 %v1430, %v1411
        %v1432 = vadd.f32 %v1431, %v1413
        %v1433 = vadd.f32 %v1432, %v1415
        %v1434 = vrot.slane %v1433, 4
        %v1435 = vadd.f32 %v1433, %v1434
        %v1436 = vrot.slane %v1435, 2
        %v1437 = vadd.f32 %v1435, %v1436
        %v1438 = vrot.slane %v1437, 1
        %v1439 = vadd.f32 %v1437, %v1438
        %v1440 = vadd.f32 %v1418, %v1439
        %1441 = vst [vmem:[%s1416] sm:$0x1] %v1440
        %1442 = vst [vmem:[%s1338] sm:$0x1] %v1361
        %1443 = vmatpush.msra.mxu0 %v1415
        %1444 = vmatpush.msra.mxu0 %v1413
        %1445 = vmatpush.msra.mxu0 %v1411
        %1446 = vmatpush.msra.mxu0 %v1409
        %1447 = vmatpush.msra.mxu0 %v1407
        %1448 = vmatpush.msra.mxu0 %v1405
        %1449 = vmatpush.msra.mxu0 %v1403
        %1450 = vmatpush.msra.mxu0 %v1401
        %1451 = vmatpush.msra.mxu0 %v1399
        %1452 = vmatpush.msra.mxu0 %v1397
        %1453 = vmatpush.msra.mxu0 %v1395
        %1454 = vmatpush.msra.mxu0 %v1393
        %1455 = vmatpush.msra.mxu0 %v1391
        %1456 = vmatpush.msra.mxu0 %v1389
        %1457 = vmatpush.msra.mxu0 %v1387
        %1458 = vmatpush.msra.mxu0 %v1385
        %1459 = vmatmul.f32.gmra.mxu0 %v792
        %v1460 = vpop.f32.mrf.mxu0
        %v1461 = vadd.f32 0.0, %v1460
        %1462 = vdwg.mxu0
        %s1463 = scalar_lea.vmem [#allocation3], 8
        %v1464 = vld [vmem:[%s1463] sm:$0xff]
        %v1466 = vperm.slane %v1364, 0
        %v1468 = vmul.f32 %v1466, %v1464
        %v1469 = vadd.f32 %v1468, %v1461
        %1470 = vst [vmem:[%s1463] sm:$0xff] %v1469
        %v1471 = vld [vmem:[#allocation2 + $0x10] sm:$0xff]
        %1472 = vxpose.xlu0.b32.start [1/16] %v726, 128
        %1473 = vxpose.xlu0.b32.cont [2/16] 0.0, 128
        %1474 = vxpose.xlu0.b32.cont [3/16] 0.0, 128
        %1475 = vxpose.xlu0.b32.cont [4/16] 0.0, 128
        %1476 = vxpose.xlu0.b32.cont [5/16] 0.0, 128
        %1477 = vxpose.xlu0.b32.cont [6/16] 0.0, 128
        %1478 = vxpose.xlu0.b32.cont [7/16] 0.0, 128
        %1479 = vxpose.xlu0.b32.cont [8/16] 0.0, 128
        %1480 = vxpose.xlu0.b32.cont [9/16] 0.0, 128
        %1481 = vxpose.xlu0.b32.cont [10/16] 0.0, 128
        %1482 = vxpose.xlu0.b32.cont [11/16] 0.0, 128
        %1483 = vxpose.xlu0.b32.cont [12/16] 0.0, 128
        %1484 = vxpose.xlu0.b32.cont [13/16] 0.0, 128
        %1485 = vxpose.xlu0.b32.cont [14/16] 0.0, 128
        %1486 = vxpose.xlu0.b32.cont [15/16] 0.0, 128
        %1487 = vxpose.xlu0.b32.end [16/16] 0.0, 128
        %v1488 = vpop.trf.xlu0
        %v1489 = vpop.trf.xlu0
        %v1490 = vpop.trf.xlu0
        %v1491 = vpop.trf.xlu0
        %v1492 = vpop.trf.xlu0
        %v1493 = vpop.trf.xlu0
        %v1494 = vpop.trf.xlu0
        %v1495 = vpop.trf.xlu0
        %v1496 = vpop.trf.xlu0
        %v1497 = vpop.trf.xlu0
        %v1498 = vpop.trf.xlu0
        %v1499 = vpop.trf.xlu0
        %v1500 = vpop.trf.xlu0
        %v1501 = vpop.trf.xlu0
        %v1502 = vpop.trf.xlu0
        %v1503 = vpop.trf.xlu0
        %v1505 = vsel %vm884, %v1488, 0
        %v1508 = vsel %vm884, %v1489, 0
        %v1511 = vsel %vm884, %v1490, 0
        %v1514 = vsel %vm884, %v1491, 0
        %v1517 = vsel %vm884, %v1492, 0
        %v1520 = vsel %vm884, %v1493, 0
        %v1523 = vsel %vm884, %v1494, 0
        %v1526 = vsel %vm884, %v1495, 0
        %v1529 = vsel %vm884, %v1496, 0
        %v1532 = vsel %vm884, %v1497, 0
        %v1535 = vsel %vm884, %v1498, 0
        %v1538 = vsel %vm884, %v1499, 0
        %v1541 = vsel %vm884, %v1500, 0
        %v1544 = vsel %vm884, %v1501, 0
        %v1547 = vsel %vm884, %v1502, 0
        %v1550 = vsel %vm884, %v1503, 0
        %1552 = vmatpush.msra.mxu0 0.0
        %1553 = vmatpush.msra.mxu0 0.0
        %1554 = vmatpush.msra.mxu0 0.0
        %1555 = vmatpush.msra.mxu0 0.0
        %1556 = vmatpush.msra.mxu0 0.0
        %1557 = vmatpush.msra.mxu0 0.0
        %1558 = vmatpush.msra.mxu0 0.0
        %1559 = vmatpush.msra.mxu0 0.0
        %1560 = vmatpush.msra.mxu0 0.0
        %1561 = vmatpush.msra.mxu0 0.0
        %1562 = vmatpush.msra.mxu0 0.0
        %1563 = vmatpush.msra.mxu0 0.0
        %1564 = vmatpush.msra.mxu0 0.0
        %1565 = vmatpush.msra.mxu0 0.0
        %1566 = vmatpush.msra.mxu0 0.0
        %1567 = vmatpush.msra.mxu0 %v1471
        %1568 = vmatmul.f32.gmra.mxu0 %v1505
        %v1569 = vpop.f32.mrf.mxu0
        %v1570 = vadd.f32 0.0, %v1569
        %1571 = vmatmul.f32.gmra.mxu0 %v1508
        %v1572 = vpop.f32.mrf.mxu0
        %v1573 = vadd.f32 0.0, %v1572
        %1574 = vmatmul.f32.gmra.mxu0 %v1511
        %v1575 = vpop.f32.mrf.mxu0
        %v1576 = vadd.f32 0.0, %v1575
        %1577 = vmatmul.f32.gmra.mxu0 %v1514
        %v1578 = vpop.f32.mrf.mxu0
        %v1579 = vadd.f32 0.0, %v1578
        %1580 = vmatmul.f32.gmra.mxu0 %v1517
        %v1581 = vpop.f32.mrf.mxu0
        %v1582 = vadd.f32 0.0, %v1581
        %1583 = vmatmul.f32.gmra.mxu0 %v1520
        %v1584 = vpop.f32.mrf.mxu0
        %v1585 = vadd.f32 0.0, %v1584
        %1586 = vmatmul.f32.gmra.mxu0 %v1523
        %v1587 = vpop.f32.mrf.mxu0
        %v1588 = vadd.f32 0.0, %v1587
        %1589 = vmatmul.f32.gmra.mxu0 %v1526
        %v1590 = vpop.f32.mrf.mxu0
        %v1591 = vadd.f32 0.0, %v1590
        %1592 = vmatmul.f32.gmra.mxu0 %v1529
        %v1593 = vpop.f32.mrf.mxu0
        %v1594 = vadd.f32 0.0, %v1593
        %1595 = vmatmul.f32.gmra.mxu0 %v1532
        %v1596 = vpop.f32.mrf.mxu0
        %v1597 = vadd.f32 0.0, %v1596
        %1598 = vmatmul.f32.gmra.mxu0 %v1535
        %v1599 = vpop.f32.mrf.mxu0
        %v1600 = vadd.f32 0.0, %v1599
        %1601 = vmatmul.f32.gmra.mxu0 %v1538
        %v1602 = vpop.f32.mrf.mxu0
        %v1603 = vadd.f32 0.0, %v1602
        %1604 = vmatmul.f32.gmra.mxu0 %v1541
        %v1605 = vpop.f32.mrf.mxu0
        %v1606 = vadd.f32 0.0, %v1605
        %1607 = vmatmul.f32.gmra.mxu0 %v1544
        %v1608 = vpop.f32.mrf.mxu0
        %v1609 = vadd.f32 0.0, %v1608
        %1610 = vmatmul.f32.gmra.mxu0 %v1547
        %v1611 = vpop.f32.mrf.mxu0
        %v1612 = vadd.f32 0.0, %v1611
        %1613 = vmatmul.f32.gmra.mxu0 %v1550
        %v1614 = vpop.f32.mrf.mxu0
        %v1615 = vadd.f32 0.0, %v1614
        %1616 = vdwg.mxu0
        %v1617 = vsel %vm1014, %v1570, -inf
        %v1618 = vsel %vm1015, %v1573, -inf
        %v1619 = vsel %vm1016, %v1576, -inf
        %v1620 = vsel %vm1017, %v1579, -inf
        %v1621 = vsel %vm1018, %v1582, -inf
        %v1622 = vsel %vm1019, %v1585, -inf
        %v1623 = vsel %vm1020, %v1588, -inf
        %v1624 = vsel %vm1021, %v1591, -inf
        %v1625 = vsel %vm1022, %v1594, -inf
        %v1626 = vsel %vm1023, %v1597, -inf
        %v1627 = vsel %vm1024, %v1600, -inf
        %v1628 = vsel %vm1025, %v1603, -inf
        %v1629 = vsel %vm1026, %v1606, -inf
        %v1630 = vsel %vm1027, %v1609, -inf
        %v1631 = vsel %vm1028, %v1612, -inf
        %v1632 = vsel %vm1029, %v1615, -inf
        %s1633 = scalar_lea.vmem [#allocation4], 2
        %v1634 = vld [vmem:[%s1633] sm:$0x1]
        %v1635 = vmax.f32 %v1617, %v1621
        %v1636 = vmax.f32 %v1618, %v1622
        %v1637 = vmax.f32 %v1619, %v1623
        %v1638 = vmax.f32 %v1620, %v1624
        %v1639 = vmax.f32 %v1635, %v1625
        %v1640 = vmax.f32 %v1636, %v1626
        %v1641 = vmax.f32 %v1637, %v1627
        %v1642 = vmax.f32 %v1638, %v1628
        %v1643 = vmax.f32 %v1639, %v1629
        %v1644 = vmax.f32 %v1640, %v1630
        %v1645 = vmax.f32 %v1641, %v1631
        %v1646 = vmax.f32 %v1642, %v1632
        %v1647 = vmax.f32 %v1643, %v1644
        %v1648 = vmax.f32 %v1645, %v1646
        %v1649 = vmax.f32 %v1647, %v1648
        %v1650 = vrot.slane %v1649, 4
        %v1651 = vmax.f32 %v1649, %v1650
        %v1652 = vrot.slane %v1651, 2
        %v1653 = vmax.f32 %v1651, %v1652
        %v1654 = vrot.slane %v1653, 1
        %v1655 = vmax.f32 %v1653, %v1654
        %v1656 = vmax.f32 %v1634, %v1655
        %v1657 = vsub.f32 %v1634, %v1656
        %v1658 = vmul.f32 %v1657, 1.442695
        %v1659 = vpow.pop %v1658
        %v1661 = vperm.slane %v1656, 0
        %v1663 = vsub.f32 %v1617, %v1661
        %v1664 = vsub.f32 %v1618, %v1661
        %v1665 = vsub.f32 %v1619, %v1661
        %v1666 = vsub.f32 %v1620, %v1661
        %v1667 = vsub.f32 %v1621, %v1661
        %v1668 = vsub.f32 %v1622, %v1661
        %v1669 = vsub.f32 %v1623, %v1661
        %v1670 = vsub.f32 %v1624, %v1661
        %v1671 = vsub.f32 %v1625, %v1661
        %v1672 = vsub.f32 %v1626, %v1661
        %v1673 = vsub.f32 %v1627, %v1661
        %v1674 = vsub.f32 %v1628, %v1661
        %v1675 = vsub.f32 %v1629, %v1661
        %v1676 = vsub.f32 %v1630, %v1661
        %v1677 = vsub.f32 %v1631, %v1661
        %v1678 = vsub.f32 %v1632, %v1661
        %v1679 = vmul.f32 %v1663, 1.442695
        %v1680 = vpow.pop %v1679
        %v1681 = vmul.f32 %v1664, 1.442695
        %v1682 = vpow.pop %v1681
        %v1683 = vmul.f32 %v1665, 1.442695
        %v1684 = vpow.pop %v1683
        %v1685 = vmul.f32 %v1666, 1.442695
        %v1686 = vpow.pop %v1685
        %v1687 = vmul.f32 %v1667, 1.442695
        %v1688 = vpow.pop %v1687
        %v1689 = vmul.f32 %v1668, 1.442695
        %v1690 = vpow.pop %v1689
        %v1691 = vmul.f32 %v1669, 1.442695
        %v1692 = vpow.pop %v1691
        %v1693 = vmul.f32 %v1670, 1.442695
        %v1694 = vpow.pop %v1693
        %v1695 = vmul.f32 %v1671, 1.442695
        %v1696 = vpow.pop %v1695
        %v1697 = vmul.f32 %v1672, 1.442695
        %v1698 = vpow.pop %v1697
        %v1699 = vmul.f32 %v1673, 1.442695
        %v1700 = vpow.pop %v1699
        %v1701 = vmul.f32 %v1674, 1.442695
        %v1702 = vpow.pop %v1701
        %v1703 = vmul.f32 %v1675, 1.442695
        %v1704 = vpow.pop %v1703
        %v1705 = vmul.f32 %v1676, 1.442695
        %v1706 = vpow.pop %v1705
        %v1707 = vmul.f32 %v1677, 1.442695
        %v1708 = vpow.pop %v1707
        %v1709 = vmul.f32 %v1678, 1.442695
        %v1710 = vpow.pop %v1709
        %s1711 = scalar_lea.vmem [#allocation5], 2
        %v1712 = vld [vmem:[%s1711] sm:$0x1]
        %v1713 = vmul.f32 %v1659, %v1712
        %v1714 = vadd.f32 %v1680, %v1682
        %v1715 = vadd.f32 %v1714, %v1684
        %v1716 = vadd.f32 %v1715, %v1686
        %v1717 = vadd.f32 %v1716, %v1688
        %v1718 = vadd.f32 %v1717, %v1690
        %v1719 = vadd.f32 %v1718, %v1692
        %v1720 = vadd.f32 %v1719, %v1694
        %v1721 = vadd.f32 %v1720, %v1696
        %v1722 = vadd.f32 %v1721, %v1698
        %v1723 = vadd.f32 %v1722, %v1700
        %v1724 = vadd.f32 %v1723, %v1702
        %v1725 = vadd.f32 %v1724, %v1704
        %v1726 = vadd.f32 %v1725, %v1706
        %v1727 = vadd.f32 %v1726, %v1708
        %v1728 = vadd.f32 %v1727, %v1710
        %v1729 = vrot.slane %v1728, 4
        %v1730 = vadd.f32 %v1728, %v1729
        %v1731 = vrot.slane %v1730, 2
        %v1732 = vadd.f32 %v1730, %v1731
        %v1733 = vrot.slane %v1732, 1
        %v1734 = vadd.f32 %v1732, %v1733
        %v1735 = vadd.f32 %v1713, %v1734
        %1736 = vst [vmem:[%s1711] sm:$0x1] %v1735
        %1737 = vst [vmem:[%s1633] sm:$0x1] %v1656
        %1738 = vmatpush.msra.mxu0 %v1710
        %1739 = vmatpush.msra.mxu0 %v1708
        %1740 = vmatpush.msra.mxu0 %v1706
        %1741 = vmatpush.msra.mxu0 %v1704
        %1742 = vmatpush.msra.mxu0 %v1702
        %1743 = vmatpush.msra.mxu0 %v1700
        %1744 = vmatpush.msra.mxu0 %v1698
        %1745 = vmatpush.msra.mxu0 %v1696
        %1746 = vmatpush.msra.mxu0 %v1694
        %1747 = vmatpush.msra.mxu0 %v1692
        %1748 = vmatpush.msra.mxu0 %v1690
        %1749 = vmatpush.msra.mxu0 %v1688
        %1750 = vmatpush.msra.mxu0 %v1686
        %1751 = vmatpush.msra.mxu0 %v1684
        %1752 = vmatpush.msra.mxu0 %v1682
        %1753 = vmatpush.msra.mxu0 %v1680
        %1754 = vmatmul.f32.gmra.mxu0 %v795
        %v1755 = vpop.f32.mrf.mxu0
        %v1756 = vadd.f32 0.0, %v1755
        %1757 = vdwg.mxu0
        %s1758 = scalar_lea.vmem [#allocation3], 16
        %v1759 = vld [vmem:[%s1758] sm:$0xff]
        %v1761 = vperm.slane %v1659, 0
        %v1763 = vmul.f32 %v1761, %v1759
        %v1764 = vadd.f32 %v1763, %v1756
        %1765 = vst [vmem:[%s1758] sm:$0xff] %v1764
        %v1766 = vld [vmem:[#allocation2 + $0x18] sm:$0xff]
        %1767 = vxpose.xlu0.b32.start [1/16] %v729, 128
        %1768 = vxpose.xlu0.b32.cont [2/16] 0.0, 128
        %1769 = vxpose.xlu0.b32.cont [3/16] 0.0, 128
        %1770 = vxpose.xlu0.b32.cont [4/16] 0.0, 128
        %1771 = vxpose.xlu0.b32.cont [5/16] 0.0, 128
        %1772 = vxpose.xlu0.b32.cont [6/16] 0.0, 128
        %1773 = vxpose.xlu0.b32.cont [7/16] 0.0, 128
        %1774 = vxpose.xlu0.b32.cont [8/16] 0.0, 128
        %1775 = vxpose.xlu0.b32.cont [9/16] 0.0, 128
        %1776 = vxpose.xlu0.b32.cont [10/16] 0.0, 128
        %1777 = vxpose.xlu0.b32.cont [11/16] 0.0, 128
        %1778 = vxpose.xlu0.b32.cont [12/16] 0.0, 128
        %1779 = vxpose.xlu0.b32.cont [13/16] 0.0, 128
        %1780 = vxpose.xlu0.b32.cont [14/16] 0.0, 128
        %1781 = vxpose.xlu0.b32.cont [15/16] 0.0, 128
        %1782 = vxpose.xlu0.b32.end [16/16] 0.0, 128
        %v1783 = vpop.trf.xlu0
        %v1784 = vpop.trf.xlu0
        %v1785 = vpop.trf.xlu0
        %v1786 = vpop.trf.xlu0
        %v1787 = vpop.trf.xlu0
        %v1788 = vpop.trf.xlu0
        %v1789 = vpop.trf.xlu0
        %v1790 = vpop.trf.xlu0
        %v1791 = vpop.trf.xlu0
        %v1792 = vpop.trf.xlu0
        %v1793 = vpop.trf.xlu0
        %v1794 = vpop.trf.xlu0
        %v1795 = vpop.trf.xlu0
        %v1796 = vpop.trf.xlu0
        %v1797 = vpop.trf.xlu0
        %v1798 = vpop.trf.xlu0
        %v1800 = vsel %vm884, %v1783, 0
        %v1803 = vsel %vm884, %v1784, 0
        %v1806 = vsel %vm884, %v1785, 0
        %v1809 = vsel %vm884, %v1786, 0
        %v1812 = vsel %vm884, %v1787, 0
        %v1815 = vsel %vm884, %v1788, 0
        %v1818 = vsel %vm884, %v1789, 0
        %v1821 = vsel %vm884, %v1790, 0
        %v1824 = vsel %vm884, %v1791, 0
        %v1827 = vsel %vm884, %v1792, 0
        %v1830 = vsel %vm884, %v1793, 0
        %v1833 = vsel %vm884, %v1794, 0
        %v1836 = vsel %vm884, %v1795, 0
        %v1839 = vsel %vm884, %v1796, 0
        %v1842 = vsel %vm884, %v1797, 0
        %v1845 = vsel %vm884, %v1798, 0
        %1847 = vmatpush.msra.mxu0 0.0
        %1848 = vmatpush.msra.mxu0 0.0
        %1849 = vmatpush.msra.mxu0 0.0
        %1850 = vmatpush.msra.mxu0 0.0
        %1851 = vmatpush.msra.mxu0 0.0
        %1852 = vmatpush.msra.mxu0 0.0
        %1853 = vmatpush.msra.mxu0 0.0
        %1854 = vmatpush.msra.mxu0 0.0
        %1855 = vmatpush.msra.mxu0 0.0
        %1856 = vmatpush.msra.mxu0 0.0
        %1857 = vmatpush.msra.mxu0 0.0
        %1858 = vmatpush.msra.mxu0 0.0
        %1859 = vmatpush.msra.mxu0 0.0
        %1860 = vmatpush.msra.mxu0 0.0
        %1861 = vmatpush.msra.mxu0 0.0
        %1862 = vmatpush.msra.mxu0 %v1766
        %1863 = vmatmul.f32.gmra.mxu0 %v1800
        %v1864 = vpop.f32.mrf.mxu0
        %v1865 = vadd.f32 0.0, %v1864
        %1866 = vmatmul.f32.gmra.mxu0 %v1803
        %v1867 = vpop.f32.mrf.mxu0
        %v1868 = vadd.f32 0.0, %v1867
        %1869 = vmatmul.f32.gmra.mxu0 %v1806
        %v1870 = vpop.f32.mrf.mxu0
        %v1871 = vadd.f32 0.0, %v1870
        %1872 = vmatmul.f32.gmra.mxu0 %v1809
        %v1873 = vpop.f32.mrf.mxu0
        %v1874 = vadd.f32 0.0, %v1873
        %1875 = vmatmul.f32.gmra.mxu0 %v1812
        %v1876 = vpop.f32.mrf.mxu0
        %v1877 = vadd.f32 0.0, %v1876
        %1878 = vmatmul.f32.gmra.mxu0 %v1815
        %v1879 = vpop.f32.mrf.mxu0
        %v1880 = vadd.f32 0.0, %v1879
        %1881 = vmatmul.f32.gmra.mxu0 %v1818
        %v1882 = vpop.f32.mrf.mxu0
        %v1883 = vadd.f32 0.0, %v1882
        %1884 = vmatmul.f32.gmra.mxu0 %v1821
        %v1885 = vpop.f32.mrf.mxu0
        %v1886 = vadd.f32 0.0, %v1885
        %1887 = vmatmul.f32.gmra.mxu0 %v1824
        %v1888 = vpop.f32.mrf.mxu0
        %v1889 = vadd.f32 0.0, %v1888
        %1890 = vmatmul.f32.gmra.mxu0 %v1827
        %v1891 = vpop.f32.mrf.mxu0
        %v1892 = vadd.f32 0.0, %v1891
        %1893 = vmatmul.f32.gmra.mxu0 %v1830
        %v1894 = vpop.f32.mrf.mxu0
        %v1895 = vadd.f32 0.0, %v1894
        %1896 = vmatmul.f32.gmra.mxu0 %v1833
        %v1897 = vpop.f32.mrf.mxu0
        %v1898 = vadd.f32 0.0, %v1897
        %1899 = vmatmul.f32.gmra.mxu0 %v1836
        %v1900 = vpop.f32.mrf.mxu0
        %v1901 = vadd.f32 0.0, %v1900
        %1902 = vmatmul.f32.gmra.mxu0 %v1839
        %v1903 = vpop.f32.mrf.mxu0
        %v1904 = vadd.f32 0.0, %v1903
        %1905 = vmatmul.f32.gmra.mxu0 %v1842
        %v1906 = vpop.f32.mrf.mxu0
        %v1907 = vadd.f32 0.0, %v1906
        %1908 = vmatmul.f32.gmra.mxu0 %v1845
        %v1909 = vpop.f32.mrf.mxu0
        %v1910 = vadd.f32 0.0, %v1909
        %1911 = vdwg.mxu0
        %v1912 = vsel %vm1014, %v1865, -inf
        %v1913 = vsel %vm1015, %v1868, -inf
        %v1914 = vsel %vm1016, %v1871, -inf
        %v1915 = vsel %vm1017, %v1874, -inf
        %v1916 = vsel %vm1018, %v1877, -inf
        %v1917 = vsel %vm1019, %v1880, -inf
        %v1918 = vsel %vm1020, %v1883, -inf
        %v1919 = vsel %vm1021, %v1886, -inf
        %v1920 = vsel %vm1022, %v1889, -inf
        %v1921 = vsel %vm1023, %v1892, -inf
        %v1922 = vsel %vm1024, %v1895, -inf
        %v1923 = vsel %vm1025, %v1898, -inf
        %v1924 = vsel %vm1026, %v1901, -inf
        %v1925 = vsel %vm1027, %v1904, -inf
        %v1926 = vsel %vm1028, %v1907, -inf
        %v1927 = vsel %vm1029, %v1910, -inf
        %s1928 = scalar_lea.vmem [#allocation4], 3
        %v1929 = vld [vmem:[%s1928] sm:$0x1]
        %v1930 = vmax.f32 %v1912, %v1916
        %v1931 = vmax.f32 %v1913, %v1917
        %v1932 = vmax.f32 %v1914, %v1918
        %v1933 = vmax.f32 %v1915, %v1919
        %v1934 = vmax.f32 %v1930, %v1920
        %v1935 = vmax.f32 %v1931, %v1921
        %v1936 = vmax.f32 %v1932, %v1922
        %v1937 = vmax.f32 %v1933, %v1923
        %v1938 = vmax.f32 %v1934, %v1924
        %v1939 = vmax.f32 %v1935, %v1925
        %v1940 = vmax.f32 %v1936, %v1926
        %v1941 = vmax.f32 %v1937, %v1927
        %v1942 = vmax.f32 %v1938, %v1939
        %v1943 = vmax.f32 %v1940, %v1941
        %v1944 = vmax.f32 %v1942, %v1943
        %v1945 = vrot.slane %v1944, 4
        %v1946 = vmax.f32 %v1944, %v1945
        %v1947 = vrot.slane %v1946, 2
        %v1948 = vmax.f32 %v1946, %v1947
        %v1949 = vrot.slane %v1948, 1
        %v1950 = vmax.f32 %v1948, %v1949
        %v1951 = vmax.f32 %v1929, %v1950
        %v1952 = vsub.f32 %v1929, %v1951
        %v1953 = vmul.f32 %v1952, 1.442695
        %v1954 = vpow.pop %v1953
        %v1956 = vperm.slane %v1951, 0
        %v1958 = vsub.f32 %v1912, %v1956
        %v1959 = vsub.f32 %v1913, %v1956
        %v1960 = vsub.f32 %v1914, %v1956
        %v1961 = vsub.f32 %v1915, %v1956
        %v1962 = vsub.f32 %v1916, %v1956
        %v1963 = vsub.f32 %v1917, %v1956
        %v1964 = vsub.f32 %v1918, %v1956
        %v1965 = vsub.f32 %v1919, %v1956
        %v1966 = vsub.f32 %v1920, %v1956
        %v1967 = vsub.f32 %v1921, %v1956
        %v1968 = vsub.f32 %v1922, %v1956
        %v1969 = vsub.f32 %v1923, %v1956
        %v1970 = vsub.f32 %v1924, %v1956
        %v1971 = vsub.f32 %v1925, %v1956
        %v1972 = vsub.f32 %v1926, %v1956
        %v1973 = vsub.f32 %v1927, %v1956
        %v1974 = vmul.f32 %v1958, 1.442695
        %v1975 = vpow.pop %v1974
        %v1976 = vmul.f32 %v1959, 1.442695
        %v1977 = vpow.pop %v1976
        %v1978 = vmul.f32 %v1960, 1.442695
        %v1979 = vpow.pop %v1978
        %v1980 = vmul.f32 %v1961, 1.442695
        %v1981 = vpow.pop %v1980
        %v1982 = vmul.f32 %v1962, 1.442695
        %v1983 = vpow.pop %v1982
        %v1984 = vmul.f32 %v1963, 1.442695
        %v1985 = vpow.pop %v1984
        %v1986 = vmul.f32 %v1964, 1.442695
        %v1987 = vpow.pop %v1986
        %v1988 = vmul.f32 %v1965, 1.442695
        %v1989 = vpow.pop %v1988
        %v1990 = vmul.f32 %v1966, 1.442695
        %v1991 = vpow.pop %v1990
        %v1992 = vmul.f32 %v1967, 1.442695
        %v1993 = vpow.pop %v1992
        %v1994 = vmul.f32 %v1968, 1.442695
        %v1995 = vpow.pop %v1994
        %v1996 = vmul.f32 %v1969, 1.442695
        %v1997 = vpow.pop %v1996
        %v1998 = vmul.f32 %v1970, 1.442695
        %v1999 = vpow.pop %v1998
        %v2000 = vmul.f32 %v1971, 1.442695
        %v2001 = vpow.pop %v2000
        %v2002 = vmul.f32 %v1972, 1.442695
        %v2003 = vpow.pop %v2002
        %v2004 = vmul.f32 %v1973, 1.442695
        %v2005 = vpow.pop %v2004
        %s2006 = scalar_lea.vmem [#allocation5], 3
        %v2007 = vld [vmem:[%s2006] sm:$0x1]
        %v2008 = vmul.f32 %v1954, %v2007
        %v2009 = vadd.f32 %v1975, %v1977
        %v2010 = vadd.f32 %v2009, %v1979
        %v2011 = vadd.f32 %v2010, %v1981
        %v2012 = vadd.f32 %v2011, %v1983
        %v2013 = vadd.f32 %v2012, %v1985
        %v2014 = vadd.f32 %v2013, %v1987
        %v2015 = vadd.f32 %v2014, %v1989
        %v2016 = vadd.f32 %v2015, %v1991
        %v2017 = vadd.f32 %v2016, %v1993
        %v2018 = vadd.f32 %v2017, %v1995
        %v2019 = vadd.f32 %v2018, %v1997
        %v2020 = vadd.f32 %v2019, %v1999
        %v2021 = vadd.f32 %v2020, %v2001
        %v2022 = vadd.f32 %v2021, %v2003
        %v2023 = vadd.f32 %v2022, %v2005
        %v2024 = vrot.slane %v2023, 4
        %v2025 = vadd.f32 %v2023, %v2024
        %v2026 = vrot.slane %v2025, 2
        %v2027 = vadd.f32 %v2025, %v2026
        %v2028 = vrot.slane %v2027, 1
        %v2029 = vadd.f32 %v2027, %v2028
        %v2030 = vadd.f32 %v2008, %v2029
        %2031 = vst [vmem:[%s2006] sm:$0x1] %v2030
        %2032 = vst [vmem:[%s1928] sm:$0x1] %v1951
        %2033 = vmatpush.msra.mxu0 %v2005
        %2034 = vmatpush.msra.mxu0 %v2003
        %2035 = vmatpush.msra.mxu0 %v2001
        %2036 = vmatpush.msra.mxu0 %v1999
        %2037 = vmatpush.msra.mxu0 %v1997
        %2038 = vmatpush.msra.mxu0 %v1995
        %2039 = vmatpush.msra.mxu0 %v1993
        %2040 = vmatpush.msra.mxu0 %v1991
        %2041 = vmatpush.msra.mxu0 %v1989
        %2042 = vmatpush.msra.mxu0 %v1987
        %2043 = vmatpush.msra.mxu0 %v1985
        %2044 = vmatpush.msra.mxu0 %v1983
        %2045 = vmatpush.msra.mxu0 %v1981
        %2046 = vmatpush.msra.mxu0 %v1979
        %2047 = vmatpush.msra.mxu0 %v1977
        %2048 = vmatpush.msra.mxu0 %v1975
        %2049 = vmatmul.f32.gmra.mxu0 %v798
        %v2050 = vpop.f32.mrf.mxu0
        %v2051 = vadd.f32 0.0, %v2050
        %2052 = vdwg.mxu0
        %s2053 = scalar_lea.vmem [#allocation3], 24
        %v2054 = vld [vmem:[%s2053] sm:$0xff]
        %v2056 = vperm.slane %v1954, 0
        %v2058 = vmul.f32 %v2056, %v2054
        %v2059 = vadd.f32 %v2058, %v2051
        %2060 = vst [vmem:[%s2053] sm:$0xff] %v2059
        // Predicated region
        $region89: #{tpu_custom_call.1} parent=63 // pred_check
          %p2061 = pneg %p559
        $region90: #{tpu_custom_call.1} parent=63 // pred_check_branch
          %2063 = sbr.rel (%p2061) target = $region92
        $region91: #{tpu_custom_call.1} parent=63 // pred_region
          %v2064 = vld [vmem:[#allocation14] sm:$0xff]
          %v2065 = vld [vmem:[#allocation14 + $0x8] sm:$0xff]
          %v2066 = vld [vmem:[#allocation14 + $0x10] sm:$0xff]
          %v2067 = vld [vmem:[#allocation14 + $0x18] sm:$0xff]
          %v2068 = vld [vmem:[%s10] sm:$0xff]
          %v2069 = vld [vmem:[%s10 + $0x8] sm:$0xff]
          %v2070 = vld [vmem:[%s10 + $0x10] sm:$0xff]
          %v2071 = vld [vmem:[%s10 + $0x18] sm:$0xff]
          %v2072 = vld [vmem:[#allocation5] sm:$0x1]
          %v2073 = vrcp.pop %v2072
          %v2074 = vmul.f32 %v2072, %v2073
          %v2075 = vsub.f32 1.0, %v2074
          %v2076 = vmul.f32 %v2073, %v2075
          %v2077 = vadd.f32 %v2073, %v2076
          %vm2078 = vweird.f32 %v2072
          %vm2079 = vweird.f32 %v2073
          %vm2080 = vmor %vm2078, %vm2079
          %v2081 = vsel %vm2080, %v2073, %v2077
          %v2082 = vand.u32 2147483647, %v2072
          %vm2083 = vcmp.eq.f32.partialorder %v2082, 8.507059e+37
          %v2084 = vand.u32 %v2072, 2147483648
          %v2085 = vor.u32 1.1754944e-38, %v2084
          %v2086 = vsel %vm2083, %v2085, %v2081
          %v2087 = vld [vmem:[#allocation3] sm:$0xff]
          %v2089 = vperm.slane %v2086, 0
          %v2091 = vmul.f32 %v2087, %v2089
          %v2093 = vsel %vm884, %v2064, 0
          %v2096 = vsel %vm884, %v2065, 0
          %v2099 = vsel %vm884, %v2066, 0
          %v2102 = vsel %vm884, %v2067, 0
          %2104 = vmatpush.msra.mxu0 0.0
          %2105 = vmatpush.msra.mxu0 0.0
          %2106 = vmatpush.msra.mxu0 0.0
          %2107 = vmatpush.msra.mxu0 0.0
          %2108 = vmatpush.msra.mxu0 0.0
          %2109 = vmatpush.msra.mxu0 0.0
          %2110 = vmatpush.msra.mxu0 0.0
          %2111 = vmatpush.msra.mxu0 0.0
          %2112 = vmatpush.msra.mxu0 0.0
          %2113 = vmatpush.msra.mxu0 0.0
          %2114 = vmatpush.msra.mxu0 0.0
          %2115 = vmatpush.msra.mxu0 0.0
          %2116 = vmatpush.msra.mxu0 0.0
          %2117 = vmatpush.msra.mxu0 0.0
          %2118 = vmatpush.msra.mxu0 0.0
          %2119 = vmatpush.msra.mxu0 %v2091
          %2120 = vmatmul.f32.gmra.mxu0 %v2093
          %v2121 = vpop.f32.mrf.mxu0
          %v2122 = vadd.f32 0.0, %v2121
          %2123 = vmatmul.f32.gmra.mxu0 %v2096
          %v2124 = vpop.f32.mrf.mxu0
          %v2125 = vadd.f32 0.0, %v2124
          %2126 = vmatmul.f32.gmra.mxu0 %v2099
          %v2127 = vpop.f32.mrf.mxu0
          %v2128 = vadd.f32 0.0, %v2127
          %2129 = vmatmul.f32.gmra.mxu0 %v2102
          %v2130 = vpop.f32.mrf.mxu0
          %v2131 = vadd.f32 0.0, %v2130
          %2132 = vdwg.mxu0
          %2134 = vset.pattern.permute.xlu0 0
          %2135 = vperm.xlu0 %2134, %v2068
          %v2136 = vpop.permute.xlu0 %2135
          %2139 = vset.pattern.permute.xlu0 0
          %2140 = vperm.xlu0 %2139, %v2069
          %v2141 = vpop.permute.xlu0 %2140
          %2144 = vset.pattern.permute.xlu0 0
          %2145 = vperm.xlu0 %2144, %v2070
          %v2146 = vpop.permute.xlu0 %2145
          %2149 = vset.pattern.permute.xlu0 0
          %2150 = vperm.xlu0 %2149, %v2071
          %v2151 = vpop.permute.xlu0 %2150
          %v2153 = vadd.f32 %v2136, %v2122
          %v2154 = vadd.f32 %v2141, %v2125
          %v2155 = vadd.f32 %v2146, %v2128
          %v2156 = vadd.f32 %v2151, %v2131
          %v2157 = vld [vmem:[%s1416] sm:$0x1]
          %v2158 = vrcp.pop %v2157
          %v2159 = vmul.f32 %v2157, %v2158
          %v2160 = vsub.f32 1.0, %v2159
          %v2161 = vmul.f32 %v2158, %v2160
          %v2162 = vadd.f32 %v2158, %v2161
          %vm2163 = vweird.f32 %v2157
          %vm2164 = vweird.f32 %v2158
          %vm2165 = vmor %vm2163, %vm2164
          %v2166 = vsel %vm2165, %v2158, %v2162
          %v2167 = vand.u32 2147483647, %v2157
          %vm2168 = vcmp.eq.f32.partialorder %v2167, 8.507059e+37
          %v2169 = vand.u32 %v2157, 2147483648
          %v2170 = vor.u32 1.1754944e-38, %v2169
          %v2171 = vsel %vm2168, %v2170, %v2166
          %v2172 = vld [vmem:[%s1463] sm:$0xff]
          %v2174 = vperm.slane %v2171, 0
          %v2176 = vmul.f32 %v2172, %v2174
          %2177 = vrot.lane.b32.xlu0 %v2064, 120
          %v2178 = vpop.permute.xlu0 %2177
          %2179 = vrot.lane.b32.xlu0 %v2065, 120
          %v2180 = vpop.permute.xlu0 %2179
          %2181 = vrot.lane.b32.xlu0 %v2066, 120
          %v2182 = vpop.permute.xlu0 %2181
          %2183 = vrot.lane.b32.xlu0 %v2067, 120
          %v2184 = vpop.permute.xlu0 %2183
          %v2185 = vsel %vm884, %v2178, 0
          %v2187 = vsel %vm884, %v2180, 0
          %v2189 = vsel %vm884, %v2182, 0
          %v2191 = vsel %vm884, %v2184, 0
          %2193 = vmatpush.msra.mxu0 0.0
          %2194 = vmatpush.msra.mxu0 0.0
          %2195 = vmatpush.msra.mxu0 0.0
          %2196 = vmatpush.msra.mxu0 0.0
          %2197 = vmatpush.msra.mxu0 0.0
          %2198 = vmatpush.msra.mxu0 0.0
          %2199 = vmatpush.msra.mxu0 0.0
          %2200 = vmatpush.msra.mxu0 0.0
          %2201 = vmatpush.msra.mxu0 0.0
          %2202 = vmatpush.msra.mxu0 0.0
          %2203 = vmatpush.msra.mxu0 0.0
          %2204 = vmatpush.msra.mxu0 0.0
          %2205 = vmatpush.msra.mxu0 0.0
          %2206 = vmatpush.msra.mxu0 0.0
          %2207 = vmatpush.msra.mxu0 0.0
          %2208 = vmatpush.msra.mxu0 %v2176
          %2209 = vmatmul.f32.gmra.mxu0 %v2185
          %v2210 = vpop.f32.mrf.mxu0
          %v2211 = vadd.f32 0.0, %v2210
          %2212 = vmatmul.f32.gmra.mxu0 %v2187
          %v2213 = vpop.f32.mrf.mxu0
          %v2214 = vadd.f32 0.0, %v2213
          %2215 = vmatmul.f32.gmra.mxu0 %v2189
          %v2216 = vpop.f32.mrf.mxu0
          %v2217 = vadd.f32 0.0, %v2216
          %2218 = vmatmul.f32.gmra.mxu0 %v2191
          %v2219 = vpop.f32.mrf.mxu0
          %v2220 = vadd.f32 0.0, %v2219
          %2221 = vdwg.mxu0
          %v2222 = vadd.f32 %v2153, %v2211
          %v2223 = vadd.f32 %v2154, %v2214
          %v2224 = vadd.f32 %v2155, %v2217
          %v2225 = vadd.f32 %v2156, %v2220
          %v2226 = vld [vmem:[%s1711] sm:$0x1]
          %v2227 = vrcp.pop %v2226
          %v2228 = vmul.f32 %v2226, %v2227
          %v2229 = vsub.f32 1.0, %v2228
          %v2230 = vmul.f32 %v2227, %v2229
          %v2231 = vadd.f32 %v2227, %v2230
          %vm2232 = vweird.f32 %v2226
          %vm2233 = vweird.f32 %v2227
          %vm2234 = vmor %vm2232, %vm2233
          %v2235 = vsel %vm2234, %v2227, %v2231
          %v2236 = vand.u32 2147483647, %v2226
          %vm2237 = vcmp.eq.f32.partialorder %v2236, 8.507059e+37
          %v2238 = vand.u32 %v2226, 2147483648
          %v2239 = vor.u32 1.1754944e-38, %v2238
          %v2240 = vsel %vm2237, %v2239, %v2235
          %v2241 = vld [vmem:[%s1758] sm:$0xff]
          %v2243 = vperm.slane %v2240, 0
          %v2245 = vmul.f32 %v2241, %v2243
          %2246 = vrot.lane.b32.xlu0 %v2064, 112
          %v2247 = vpop.permute.xlu0 %2246
          %2248 = vrot.lane.b32.xlu0 %v2065, 112
          %v2249 = vpop.permute.xlu0 %2248
          %2250 = vrot.lane.b32.xlu0 %v2066, 112
          %v2251 = vpop.permute.xlu0 %2250
          %2252 = vrot.lane.b32.xlu0 %v2067, 112
          %v2253 = vpop.permute.xlu0 %2252
          %v2254 = vsel %vm884, %v2247, 0
          %v2256 = vsel %vm884, %v2249, 0
          %v2258 = vsel %vm884, %v2251, 0
          %v2260 = vsel %vm884, %v2253, 0
          %2262 = vmatpush.msra.mxu0 0.0
          %2263 = vmatpush.msra.mxu0 0.0
          %2264 = vmatpush.msra.mxu0 0.0
          %2265 = vmatpush.msra.mxu0 0.0
          %2266 = vmatpush.msra.mxu0 0.0
          %2267 = vmatpush.msra.mxu0 0.0
          %2268 = vmatpush.msra.mxu0 0.0
          %2269 = vmatpush.msra.mxu0 0.0
          %2270 = vmatpush.msra.mxu0 0.0
          %2271 = vmatpush.msra.mxu0 0.0
          %2272 = vmatpush.msra.mxu0 0.0
          %2273 = vmatpush.msra.mxu0 0.0
          %2274 = vmatpush.msra.mxu0 0.0
          %2275 = vmatpush.msra.mxu0 0.0
          %2276 = vmatpush.msra.mxu0 0.0
          %2277 = vmatpush.msra.mxu0 %v2245
          %2278 = vmatmul.f32.gmra.mxu0 %v2254
          %v2279 = vpop.f32.mrf.mxu0
          %v2280 = vadd.f32 0.0, %v2279
          %2281 = vmatmul.f32.gmra.mxu0 %v2256
          %v2282 = vpop.f32.mrf.mxu0
          %v2283 = vadd.f32 0.0, %v2282
          %2284 = vmatmul.f32.gmra.mxu0 %v2258
          %v2285 = vpop.f32.mrf.mxu0
          %v2286 = vadd.f32 0.0, %v2285
          %2287 = vmatmul.f32.gmra.mxu0 %v2260
          %v2288 = vpop.f32.mrf.mxu0
          %v2289 = vadd.f32 0.0, %v2288
          %2290 = vdwg.mxu0
          %v2291 = vadd.f32 %v2222, %v2280
          %v2292 = vadd.f32 %v2223, %v2283
          %v2293 = vadd.f32 %v2224, %v2286
          %v2294 = vadd.f32 %v2225, %v2289
          %v2295 = vld [vmem:[%s2006] sm:$0x1]
          %v2296 = vrcp.pop %v2295
          %v2297 = vmul.f32 %v2295, %v2296
          %v2298 = vsub.f32 1.0, %v2297
          %v2299 = vmul.f32 %v2296, %v2298
          %v2300 = vadd.f32 %v2296, %v2299
          %vm2301 = vweird.f32 %v2295
          %vm2302 = vweird.f32 %v2296
          %vm2303 = vmor %vm2301, %vm2302
          %v2304 = vsel %vm2303, %v2296, %v2300
          %v2305 = vand.u32 2147483647, %v2295
          %vm2306 = vcmp.eq.f32.partialorder %v2305, 8.507059e+37
          %v2307 = vand.u32 %v2295, 2147483648
          %v2308 = vor.u32 1.1754944e-38, %v2307
          %v2309 = vsel %vm2306, %v2308, %v2304
          %v2310 = vld [vmem:[%s2053] sm:$0xff]
          %v2312 = vperm.slane %v2309, 0
          %v2314 = vmul.f32 %v2310, %v2312
          %2315 = vrot.lane.b32.xlu0 %v2064, 104
          %v2316 = vpop.permute.xlu0 %2315
          %2317 = vrot.lane.b32.xlu0 %v2065, 104
          %v2318 = vpop.permute.xlu0 %2317
          %2319 = vrot.lane.b32.xlu0 %v2066, 104
          %v2320 = vpop.permute.xlu0 %2319
          %2321 = vrot.lane.b32.xlu0 %v2067, 104
          %v2322 = vpop.permute.xlu0 %2321
          %v2323 = vsel %vm884, %v2316, 0
          %v2325 = vsel %vm884, %v2318, 0
          %v2327 = vsel %vm884, %v2320, 0
          %v2329 = vsel %vm884, %v2322, 0
          %2331 = vmatpush.msra.mxu0 0.0
          %2332 = vmatpush.msra.mxu0 0.0
          %2333 = vmatpush.msra.mxu0 0.0
          %2334 = vmatpush.msra.mxu0 0.0
          %2335 = vmatpush.msra.mxu0 0.0
          %2336 = vmatpush.msra.mxu0 0.0
          %2337 = vmatpush.msra.mxu0 0.0
          %2338 = vmatpush.msra.mxu0 0.0
          %2339 = vmatpush.msra.mxu0 0.0
          %2340 = vmatpush.msra.mxu0 0.0
          %2341 = vmatpush.msra.mxu0 0.0
          %2342 = vmatpush.msra.mxu0 0.0
          %2343 = vmatpush.msra.mxu0 0.0
          %2344 = vmatpush.msra.mxu0 0.0
          %2345 = vmatpush.msra.mxu0 0.0
          %2346 = vmatpush.msra.mxu0 %v2314
          %2347 = vmatmul.f32.gmra.mxu0 %v2323
          %v2348 = vpop.f32.mrf.mxu0
          %v2349 = vadd.f32 0.0, %v2348
          %2350 = vmatmul.f32.gmra.mxu0 %v2325
          %v2351 = vpop.f32.mrf.mxu0
          %v2352 = vadd.f32 0.0, %v2351
          %2353 = vmatmul.f32.gmra.mxu0 %v2327
          %v2354 = vpop.f32.mrf.mxu0
          %v2355 = vadd.f32 0.0, %v2354
          %2356 = vmatmul.f32.gmra.mxu0 %v2329
          %v2357 = vpop.f32.mrf.mxu0
          %v2358 = vadd.f32 0.0, %v2357
          %2359 = vdwg.mxu0
          %v2360 = vadd.f32 %v2291, %v2349
          %v2361 = vadd.f32 %v2292, %v2352
          %v2362 = vadd.f32 %v2293, %v2355
          %v2363 = vadd.f32 %v2294, %v2358
          %2364 = vst [vmem:[%s542] sm:$0xff] %v2360
          %2365 = vst [vmem:[%s542 + $0x8] sm:$0xff] %v2361
          %2366 = vst [vmem:[%s542 + $0x10] sm:$0xff] %v2362
          %2367 = vst [vmem:[%s542 + $0x18] sm:$0xff] %v2363
        $region92: #{tpu_custom_call.1} parent=63 // pred_fallthru
          _
        %s2368 = sand.u32 %s311, 1
        %s2369 = scalar_lea.sflag [#allocation8], %s2368
        %s2370 = sand.u32 %s311, 1
        %s2371 = smul.addr %s2370, 32
        %s2372 = scalar_lea.vmem [#allocation15], %s2371
        // Predicated region
        $region93: #{tpu_custom_call.1} parent=63 // pred_check
          %p2373 = pneg %p321
        $region94: #{tpu_custom_call.1} parent=63 // pred_check_branch
          %2375 = sbr.rel (%p2373) target = $region96
        $region95: #{tpu_custom_call.1} parent=63 // pred_region
          %2377 = vsyncadd %s2369, 0
          %s2378 = smul.addr %s35, 4
          %s2379 = sadd.s32 %s36, %s2378
          %s2380 = smul.addr %s2379, 8
          %s2381 = scalar_lea.hbm %s11, %s2380
          %s2382 = sshll.u32 %s2372, 4
          %s2383 = int_to_ptr.vmem [resolvable:$true] %s2382
          %s2384 = sshll.u32 %s2381, 4
          %s2385 = int_to_ptr.hbm [resolvable:$true] %s2384
          %2390 = dma.vmem_to_hbm [thread:$0]  %s2383, 512, %s2385, %s2369, 128, 128, 8
        $region96: #{tpu_custom_call.1} parent=63 // pred_fallthru
          _
      $region64: #{tpu_custom_call.1} parent=5 // pred_fallthru
        _
      %p2391 = scmp.le.s32.totalorder 2, %s25
      // Predicated region
      $region97: #{tpu_custom_call.1} parent=5 // pred_check
        %p2392 = pneg %p2391
      $region98: #{tpu_custom_call.1} parent=5 // pred_check_branch
        %2394 = sbr.rel (%p2392) target = $region100
      $region99: #{tpu_custom_call.1} parent=5 // pred_region
        %s2395 = ssub.s32 %s25, 2
        // Predicated region
        $region101: #{tpu_custom_call.1} parent=99 // pred_check
          %p2396 = pneg %p327
        $region102: #{tpu_custom_call.1} parent=99 // pred_check_branch
          %2398 = sbr.rel (%p2396) target = $region104
        $region103: #{tpu_custom_call.1} parent=99 // pred_region
          %s2399 = sand.u32 %s312, 1
          %s2400 = scalar_lea.sflag [#allocation8], %s2399
          %s2401 = sand.u32 %s312, 1
          %s2402 = smul.addr %s2401, 32
          %s2403 = scalar_lea.vmem [#allocation15], %s2402
          %2405 = dma.done %s2400, 512
        $region104: #{tpu_custom_call.1} parent=99 // pred_fallthru
          _
      $region100: #{tpu_custom_call.1} parent=5 // pred_fallthru
        _
    $region6: #{tpu_custom_call.1} parent=1 // loop_footer
      %s29 = sadd.s32 1, %s25
    $region7: #{tpu_custom_call.1} parent=1 // loop_footer_branch
      %24 = sbr.rel target = $region3
    $region8: #{tpu_custom_call.1} parent=1 // loop_exit
      _
    %2406 = vsyncpa [#allocation7], 1
    %s2407 = scalar_lea.sflag [#allocation7], 1
    %2408 = vsyncpa %s2407, 1
    %2409 = vsyncpa [#allocation10], 1
    %2410 = vsyncpa [#allocation13], 1
    %2411 = vsyncpa [#allocation8], 1
    %s2412 = scalar_lea.sflag [#allocation8], 1
    %2413 = vsyncpa %s2412, 1

</llo_original>
